<compile_context>
chip_gen: v7x
topology: tpu7x:2x2x1
jax: 0.10.0
libtpu: 0.0.40
codegen_flags: <defaults>
</compile_context>

<pallas_src>
import functools

import jax
import jax.numpy as jnp
from jax import lax
from jax.experimental import pallas as pl
from jax.experimental.pallas import tpu as pltpu


def _bert_embeddings_kernel(
    # scalar-prefetch refs (SMEM)
    input_ids_smem,        # (B, S) int32
    position_ids_smem,     # (1, S) int32
    # VMEM inputs
    token_type_ref,        # (1, TS, 1) int32
    emb_weight_ref,        # (1, TS, 1) f32
    word_tab_hbm,          # (V, H) f32, stays in HBM (pl.ANY)
    tok_tab_ref,           # (T, H) f32
    pos_tab_ref,           # (P, H) f32
    gamma_ref,             # (1, H) f32
    beta_ref,              # (1, H) f32
    # outputs
    emb_out_ref,           # (1, TS, H) f32
    inputs_embeds_out_ref, # (1, TS, H) f32
    # scratch
    word_buf,              # (TS, H) f32 VMEM  (gathered word rows)
    pos_buf,               # (TS, H) f32 VMEM  (only used on the general path)
    dma_sem,               # DMA semaphore, shape (1,)
    *, layer_norm_eps, seq_tile, num_token_types, arange_positions, unroll):
  b = pl.program_id(0)
  s0 = pl.program_id(1) * seq_tile
  TS = seq_tile
  H = word_buf.shape[1]

  # ---- issue the word-row gather DMAs (HBM -> VMEM) first so they overlap
  # ---- with the VPU work below.
  def _issue(i, carry):
    row = input_ids_smem[b, s0 + i]
    pltpu.make_async_copy(
        word_tab_hbm.at[pl.ds(row, 1), :],
        word_buf.at[pl.ds(i, 1), :],
        dma_sem.at[0]).start()
    return carry
  lax.fori_loop(0, TS, _issue, 0, unroll=unroll)

  # ---- token-type embedding: VPU select over the (small) T rows ----
  tt_col = token_type_ref[0]                                   # (TS, 1) int32
  tok_emb = jnp.broadcast_to(tok_tab_ref[pl.ds(0, 1), :], (TS, H))
  for t in range(1, num_token_types):                          # static, T is tiny
    row_t = jnp.broadcast_to(tok_tab_ref[pl.ds(t, 1), :], (TS, H))
    tok_emb = jnp.where(jnp.broadcast_to(tt_col == t, (TS, H)), row_t, tok_emb)

  # ---- position embedding (grid-invariant; tiny VMEM-resident table) ----
  if arange_positions:
    # Standard BERT: position_ids is (possibly offset) arange, so the rows for
    # this sequence tile are contiguous -> single dynamic slice, no gather.
    p0 = position_ids_smem[0, s0]
    pos_emb = pos_tab_ref[pl.ds(p0, TS), :]                    # (TS, H)
  else:
    def _gather_pos(i, carry):
      p = position_ids_smem[0, s0 + i]
      pos_buf[pl.ds(i, 1), :] = pos_tab_ref[pl.ds(p, 1), :]
      return carry
    lax.fori_loop(0, TS, _gather_pos, 0, unroll=unroll)
    pos_emb = pos_buf[...]                                     # (TS, H)

  # ---- wait for all word-row DMAs, then apply the per-token scale ----
  def _wait(i, carry):
    pltpu.make_async_copy(
        word_tab_hbm.at[pl.ds(0, 1), :],
        word_buf.at[pl.ds(i, 1), :],
        dma_sem.at[0]).wait()
    return carry
  lax.fori_loop(0, TS, _wait, 0, unroll=unroll)

  w_col = emb_weight_ref[0]                                    # (TS, 1) f32
  inputs_embeds = word_buf[...] * w_col                        # (TS, H)

  emb = inputs_embeds + tok_emb + pos_emb                      # (TS, H)

  # LayerNorm over the hidden axis (biased variance), f32 throughout.
  mean = jnp.mean(emb, axis=-1, keepdims=True)
  centered = emb - mean
  var = jnp.mean(centered * centered, axis=-1, keepdims=True)
  normed = centered * lax.rsqrt(var + layer_norm_eps)
  normed = normed * gamma_ref[...] + beta_ref[...]

  # TODO(synk): nn.Dropout is identity in eval mode; training-mode RNG dropout not implemented.
  emb_out_ref[0, :, :] = normed
  inputs_embeds_out_ref[0, :, :] = inputs_embeds


def bert_embeddings(input_ids, token_type_ids, position_ids, embedding_weight,
                    word_table, tok_table, pos_table, gamma, beta,
                    layer_norm_eps=1e-12, seq_tile=512, arange_positions=True):
  B, S = input_ids.shape
  V, H = word_table.shape
  T = tok_table.shape[0]
  P = pos_table.shape[0]

  TS = S if S <= seq_tile else seq_tile
  assert S % TS == 0, "seq length must be divisible by the sequence tile"
  num_tiles = S // TS
  unroll = bool(TS <= 32)

  input_ids = input_ids.astype(jnp.int32)
  position_ids = position_ids.reshape(1, S).astype(jnp.int32)
  token_type_3d = token_type_ids.astype(jnp.int32).reshape(B, S, 1)
  emb_weight_3d = embedding_weight.astype(jnp.float32).reshape(B, S, 1)
  gamma = gamma.reshape(1, H).astype(jnp.float32)
  beta = beta.reshape(1, H).astype(jnp.float32)

  kernel = functools.partial(
      _bert_embeddings_kernel,
      layer_norm_eps=layer_norm_eps, seq_tile=TS, num_token_types=T,
      arange_positions=arange_positions, unroll=unroll)

  grid_spec = pltpu.PrefetchScalarGridSpec(
      num_scalar_prefetch=2,
      grid=(B, num_tiles),
      in_specs=[
          pl.BlockSpec((1, TS, 1), lambda b, j, ids, pids: (b, j, 0)),  # token_type_ids
          pl.BlockSpec((1, TS, 1), lambda b, j, ids, pids: (b, j, 0)),  # embedding_weight
          pl.BlockSpec(memory_space=pl.ANY),                            # word table (HBM)
          pl.BlockSpec((T, H), lambda b, j, ids, pids: (0, 0)),         # token-type table
          pl.BlockSpec((P, H), lambda b, j, ids, pids: (0, 0)),         # position table
          pl.BlockSpec((1, H), lambda b, j, ids, pids: (0, 0)),         # LayerNorm gamma
          pl.BlockSpec((1, H), lambda b, j, ids, pids: (0, 0)),         # LayerNorm beta
      ],
      out_specs=[
          pl.BlockSpec((1, TS, H), lambda b, j, ids, pids: (b, j, 0)),  # embeddings
          pl.BlockSpec((1, TS, H), lambda b, j, ids, pids: (b, j, 0)),  # inputs_embeds
      ],
      scratch_shapes=[
          pltpu.VMEM((TS, H), jnp.float32),   # gathered word rows
          pltpu.VMEM((TS, H), jnp.float32),   # gathered position rows (fallback path)
          pltpu.SemaphoreType.DMA((1,)),
      ])

  out_shape = (jax.ShapeDtypeStruct((B, S, H), jnp.float32),
               jax.ShapeDtypeStruct((B, S, H), jnp.float32))

  return pl.pallas_call(
      kernel,
      out_shape=out_shape,
      grid_spec=grid_spec,
      compiler_params=pltpu.CompilerParams(
          dimension_semantics=("parallel", "parallel")),
  )(input_ids, position_ids,
    token_type_3d, emb_weight_3d,
    word_table.astype(jnp.float32), tok_table.astype(jnp.float32),
    pos_table.astype(jnp.float32), gamma, beta)


def reference(input_ids, token_type_ids, position_ids, embedding_weight,
              word_table, tok_table, pos_table, gamma, beta, eps=1e-12):
  inputs_embeds = word_table[input_ids] * embedding_weight[..., None]
  emb = inputs_embeds + tok_table[token_type_ids] + pos_table[position_ids]
  mean = emb.mean(-1, keepdims=True)
  var = ((emb - mean) ** 2).mean(-1, keepdims=True)
  normed = (emb - mean) / jnp.sqrt(var + eps) * gamma.reshape(1, 1, -1) \
      + beta.reshape(1, 1, -1)
  return normed, inputs_embeds


if __name__ == "__main__":
  # Small synthetic config: vocab=64, hidden=32, max_pos=16, type_vocab=2,
  # pad_token_id=0, layer_norm_eps=1e-12, batch=2, seq=8.
  B, S, H = 2, 8, 32
  V, P, T = 64, 16, 2
  eps = 1e-12

  key = jax.random.PRNGKey(0)
  k_word, k_tok, k_pos, k_ids, k_w = jax.random.split(key, 5)

  word_table = 0.02 * jax.random.normal(k_word, (V, H), jnp.float32)
  word_table = word_table.at[0].set(0.0)  # padding_idx=0 row is zero-initialized
  tok_table = 0.02 * jax.random.normal(k_tok, (T, H), jnp.float32)
  pos_table = 0.02 * jax.random.normal(k_pos, (P, H), jnp.float32)
  gamma = jnp.ones((1, H), jnp.float32)
  beta = jnp.zeros((1, H), jnp.float32)

  input_ids = jax.random.randint(k_ids, (B, S), 0, V, dtype=jnp.int32)
  token_type_ids = jnp.zeros((B, S), jnp.int32).at[:, S // 2:].set(1)
  position_ids = jnp.arange(S, dtype=jnp.int32)[None, :]          # (1, S)
  embedding_weight = 0.5 + jax.random.uniform(k_w, (B, S), jnp.float32)

  emb_ref, inp_ref = reference(
      input_ids, token_type_ids, position_ids, embedding_weight,
      word_table, tok_table, pos_table, gamma, beta, eps=eps)

  # Fast path: standard arange position_ids (contiguous slice of the table).
  emb, inp_emb = bert_embeddings(
      input_ids, token_type_ids, position_ids, embedding_weight,
      word_table, tok_table, pos_table, gamma, beta, layer_norm_eps=eps,
      arange_positions=True)
  jax.block_until_ready((emb, inp_emb))
  assert emb.shape == (B, S, H) and inp_emb.shape == (B, S, H)
  assert jnp.allclose(inp_emb, inp_ref, atol=1e-5, rtol=1e-5)
  assert jnp.allclose(emb, emb_ref, atol=1e-4, rtol=1e-4)

  # General path: arbitrary position_ids gathered per token.
  emb2, inp_emb2 = bert_embeddings(
      input_ids, token_type_ids, position_ids, embedding_weight,
      word_table, tok_table, pos_table, gamma, beta, layer_norm_eps=eps,
      arange_positions=False)
  jax.block_until_ready((emb2, inp_emb2))
  assert jnp.allclose(inp_emb2, inp_ref, atol=1e-5, rtol=1e-5)
  assert jnp.allclose(emb2, emb_ref, atol=1e-4, rtol=1e-4)

  print("KERNEL_OK")
</pallas_src>

<mosaic_0001>
module attributes {stable_mosaic.version = 11 : i64} {
  func.func @_bert_embeddings_kernel(%arg0: i32, %arg1: i32, %arg2: memref<2x8xi32, #tpu.memory_space<smem>>, %arg3: memref<1x8xi32, #tpu.memory_space<smem>>, %arg4: memref<1x8x1xi32, #tpu.memory_space<vmem>>, %arg5: memref<1x8x1xf32, #tpu.memory_space<vmem>>, %arg6: memref<64x32xf32, #tpu.memory_space<any>>, %arg7: memref<2x32xf32, #tpu.memory_space<vmem>>, %arg8: memref<16x32xf32, #tpu.memory_space<vmem>>, %arg9: memref<1x32xf32, #tpu.memory_space<vmem>>, %arg10: memref<1x32xf32, #tpu.memory_space<vmem>>, %arg11: memref<1x8x32xf32, #tpu.memory_space<vmem>>, %arg12: memref<1x8x32xf32, #tpu.memory_space<vmem>>, %arg13: memref<8x32xf32, #tpu.memory_space<vmem>>, %arg14: memref<8x32xf32, #tpu.memory_space<vmem>>, %arg15: memref<1x!tpu.dma_semaphore, #tpu.memory_space<semaphore_mem>>) attributes {dimension_semantics = [#tpu.dimension_semantics<parallel>, #tpu.dimension_semantics<parallel>], iteration_bounds = array<i64: 2, 1>, scalar_prefetch = 2 : i64, scratch_operands = 3 : i64, tpu.core_type = #tpu.core_type<tc>, window_params = [{transform_indices = @transform_0, window_bounds = array<i64: 1, 8, 1>}, {transform_indices = @transform_1, window_bounds = array<i64: 1, 8, 1>}, {}, {pipeline_mode = #tpu.pipeline_mode<synchronous>, transform_indices = @transform_3, window_bounds = array<i64: 2, 32>}, {pipeline_mode = #tpu.pipeline_mode<synchronous>, transform_indices = @transform_4, window_bounds = array<i64: 16, 32>}, {pipeline_mode = #tpu.pipeline_mode<synchronous>, transform_indices = @transform_5, window_bounds = array<i64: 1, 32>}, {pipeline_mode = #tpu.pipeline_mode<synchronous>, transform_indices = @transform_6, window_bounds = array<i64: 1, 32>}, {transform_indices = @transform_7, window_bounds = array<i64: 1, 8, 32>}, {transform_indices = @transform_8, window_bounds = array<i64: 1, 8, 32>}]} {
    %c8_i32 = arith.constant 8 : i32
    %0 = arith.muli %arg1, %c8_i32 : i32
    %c0_i32 = arith.constant 0 : i32
    %1 = arith.addi %0, %c0_i32 : i32
    %2 = arith.index_cast %arg0 : i32 to index
    %3 = arith.index_cast %1 : i32 to index
    %4 = memref.load %arg2[%2, %3] : memref<2x8xi32, #tpu.memory_space<smem>>
    %c0_i32_0 = arith.constant 0 : i32
    %c0_i32_1 = arith.constant 0 : i32
    %5 = tpu.memref_slice %arg6[%4, %c0_i32_1] : memref<64x32xf32, #tpu.memory_space<any>> -> memref<1x32xf32, #tpu.memory_space<any>>
    %c0_i32_2 = arith.constant 0 : i32
    %6 = tpu.memref_slice %arg13[%c0_i32, %c0_i32_2] : memref<8x32xf32, #tpu.memory_space<vmem>> -> memref<1x32xf32, #tpu.memory_space<vmem>>
    %7 = tpu.memref_slice %arg15[%c0_i32_0] : memref<1x!tpu.dma_semaphore, #tpu.memory_space<semaphore_mem>> -> memref<1x!tpu.dma_semaphore, #tpu.memory_space<semaphore_mem>>
    %8 = tpu.memref_squeeze %7 : memref<1x!tpu.dma_semaphore, #tpu.memory_space<semaphore_mem>> -> memref<!tpu.dma_semaphore, #tpu.memory_space<semaphore_mem>>
    tpu.enqueue_dma source(%5 : memref<1x32xf32, #tpu.memory_space<any>>) target(%6 : memref<1x32xf32, #tpu.memory_space<vmem>>) target_semaphore(%8 : memref<!tpu.dma_semaphore, #tpu.memory_space<semaphore_mem>>)
    %c1_i32 = arith.constant 1 : i32
    %9 = arith.addi %0, %c1_i32 : i32
    %10 = arith.index_cast %arg0 : i32 to index
    %11 = arith.index_cast %9 : i32 to index
    %12 = memref.load %arg2[%10, %11] : memref<2x8xi32, #tpu.memory_space<smem>>
    %c0_i32_3 = arith.constant 0 : i32
    %c0_i32_4 = arith.constant 0 : i32
    %13 = tpu.memref_slice %arg6[%12, %c0_i32_4] : memref<64x32xf32, #tpu.memory_space<any>> -> memref<1x32xf32, #tpu.memory_space<any>>
    %c0_i32_5 = arith.constant 0 : i32
    %14 = tpu.memref_slice %arg13[%c1_i32, %c0_i32_5] : memref<8x32xf32, #tpu.memory_space<vmem>> -> memref<1x32xf32, #tpu.memory_space<vmem>>
    %15 = tpu.memref_slice %arg15[%c0_i32_3] : memref<1x!tpu.dma_semaphore, #tpu.memory_space<semaphore_mem>> -> memref<1x!tpu.dma_semaphore, #tpu.memory_space<semaphore_mem>>
    %16 = tpu.memref_squeeze %15 : memref<1x!tpu.dma_semaphore, #tpu.memory_space<semaphore_mem>> -> memref<!tpu.dma_semaphore, #tpu.memory_space<semaphore_mem>>
    tpu.enqueue_dma source(%13 : memref<1x32xf32, #tpu.memory_space<any>>) target(%14 : memref<1x32xf32, #tpu.memory_space<vmem>>) target_semaphore(%16 : memref<!tpu.dma_semaphore, #tpu.memory_space<semaphore_mem>>)
    %c2_i32 = arith.constant 2 : i32
    %17 = arith.addi %0, %c2_i32 : i32
    %18 = arith.index_cast %arg0 : i32 to index
    %19 = arith.index_cast %17 : i32 to index
    %20 = memref.load %arg2[%18, %19] : memref<2x8xi32, #tpu.memory_space<smem>>
    %c0_i32_6 = arith.constant 0 : i32
    %c0_i32_7 = arith.constant 0 : i32
    %21 = tpu.memref_slice %arg6[%20, %c0_i32_7] : memref<64x32xf32, #tpu.memory_space<any>> -> memref<1x32xf32, #tpu.memory_space<any>>
    %c0_i32_8 = arith.constant 0 : i32
    %22 = tpu.memref_slice %arg13[%c2_i32, %c0_i32_8] : memref<8x32xf32, #tpu.memory_space<vmem>> -> memref<1x32xf32, #tpu.memory_space<vmem>>
    %23 = tpu.memref_slice %arg15[%c0_i32_6] : memref<1x!tpu.dma_semaphore, #tpu.memory_space<semaphore_mem>> -> memref<1x!tpu.dma_semaphore, #tpu.memory_space<semaphore_mem>>
    %24 = tpu.memref_squeeze %23 : memref<1x!tpu.dma_semaphore, #tpu.memory_space<semaphore_mem>> -> memref<!tpu.dma_semaphore, #tpu.memory_space<semaphore_mem>>
    tpu.enqueue_dma source(%21 : memref<1x32xf32, #tpu.memory_space<any>>) target(%22 : memref<1x32xf32, #tpu.memory_space<vmem>>) target_semaphore(%24 : memref<!tpu.dma_semaphore, #tpu.memory_space<semaphore_mem>>)
    %c3_i32 = arith.constant 3 : i32
    %25 = arith.addi %0, %c3_i32 : i32
    %26 = arith.index_cast %arg0 : i32 to index
    %27 = arith.index_cast %25 : i32 to index
    %28 = memref.load %arg2[%26, %27] : memref<2x8xi32, #tpu.memory_space<smem>>
    %c0_i32_9 = arith.constant 0 : i32
    %c0_i32_10 = arith.constant 0 : i32
    %29 = tpu.memref_slice %arg6[%28, %c0_i32_10] : memref<64x32xf32, #tpu.memory_space<any>> -> memref<1x32xf32, #tpu.memory_space<any>>
    %c0_i32_11 = arith.constant 0 : i32
    %30 = tpu.memref_slice %arg13[%c3_i32, %c0_i32_11] : memref<8x32xf32, #tpu.memory_space<vmem>> -> memref<1x32xf32, #tpu.memory_space<vmem>>
    %31 = tpu.memref_slice %arg15[%c0_i32_9] : memref<1x!tpu.dma_semaphore, #tpu.memory_space<semaphore_mem>> -> memref<1x!tpu.dma_semaphore, #tpu.memory_space<semaphore_mem>>
    %32 = tpu.memref_squeeze %31 : memref<1x!tpu.dma_semaphore, #tpu.memory_space<semaphore_mem>> -> memref<!tpu.dma_semaphore, #tpu.memory_space<semaphore_mem>>
    tpu.enqueue_dma source(%29 : memref<1x32xf32, #tpu.memory_space<any>>) target(%30 : memref<1x32xf32, #tpu.memory_space<vmem>>) target_semaphore(%32 : memref<!tpu.dma_semaphore, #tpu.memory_space<semaphore_mem>>)
    %c4_i32 = arith.constant 4 : i32
    %33 = arith.addi %0, %c4_i32 : i32
    %34 = arith.index_cast %arg0 : i32 to index
    %35 = arith.index_cast %33 : i32 to index
    %36 = memref.load %arg2[%34, %35] : memref<2x8xi32, #tpu.memory_space<smem>>
    %c0_i32_12 = arith.constant 0 : i32
    %c0_i32_13 = arith.constant 0 : i32
    %37 = tpu.memref_slice %arg6[%36, %c0_i32_13] : memref<64x32xf32, #tpu.memory_space<any>> -> memref<1x32xf32, #tpu.memory_space<any>>
    %c0_i32_14 = arith.constant 0 : i32
    %38 = tpu.memref_slice %arg13[%c4_i32, %c0_i32_14] : memref<8x32xf32, #tpu.memory_space<vmem>> -> memref<1x32xf32, #tpu.memory_space<vmem>>
    %39 = tpu.memref_slice %arg15[%c0_i32_12] : memref<1x!tpu.dma_semaphore, #tpu.memory_space<semaphore_mem>> -> memref<1x!tpu.dma_semaphore, #tpu.memory_space<semaphore_mem>>
    %40 = tpu.memref_squeeze %39 : memref<1x!tpu.dma_semaphore, #tpu.memory_space<semaphore_mem>> -> memref<!tpu.dma_semaphore, #tpu.memory_space<semaphore_mem>>
    tpu.enqueue_dma source(%37 : memref<1x32xf32, #tpu.memory_space<any>>) target(%38 : memref<1x32xf32, #tpu.memory_space<vmem>>) target_semaphore(%40 : memref<!tpu.dma_semaphore, #tpu.memory_space<semaphore_mem>>)
    %c5_i32 = arith.constant 5 : i32
    %41 = arith.addi %0, %c5_i32 : i32
    %42 = arith.index_cast %arg0 : i32 to index
    %43 = arith.index_cast %41 : i32 to index
    %44 = memref.load %arg2[%42, %43] : memref<2x8xi32, #tpu.memory_space<smem>>
    %c0_i32_15 = arith.constant 0 : i32
    %c0_i32_16 = arith.constant 0 : i32
    %45 = tpu.memref_slice %arg6[%44, %c0_i32_16] : memref<64x32xf32, #tpu.memory_space<any>> -> memref<1x32xf32, #tpu.memory_space<any>>
    %c0_i32_17 = arith.constant 0 : i32
    %46 = tpu.memref_slice %arg13[%c5_i32, %c0_i32_17] : memref<8x32xf32, #tpu.memory_space<vmem>> -> memref<1x32xf32, #tpu.memory_space<vmem>>
    %47 = tpu.memref_slice %arg15[%c0_i32_15] : memref<1x!tpu.dma_semaphore, #tpu.memory_space<semaphore_mem>> -> memref<1x!tpu.dma_semaphore, #tpu.memory_space<semaphore_mem>>
    %48 = tpu.memref_squeeze %47 : memref<1x!tpu.dma_semaphore, #tpu.memory_space<semaphore_mem>> -> memref<!tpu.dma_semaphore, #tpu.memory_space<semaphore_mem>>
    tpu.enqueue_dma source(%45 : memref<1x32xf32, #tpu.memory_space<any>>) target(%46 : memref<1x32xf32, #tpu.memory_space<vmem>>) target_semaphore(%48 : memref<!tpu.dma_semaphore, #tpu.memory_space<semaphore_mem>>)
    %c6_i32 = arith.constant 6 : i32
    %49 = arith.addi %0, %c6_i32 : i32
    %50 = arith.index_cast %arg0 : i32 to index
    %51 = arith.index_cast %49 : i32 to index
    %52 = memref.load %arg2[%50, %51] : memref<2x8xi32, #tpu.memory_space<smem>>
    %c0_i32_18 = arith.constant 0 : i32
    %c0_i32_19 = arith.constant 0 : i32
    %53 = tpu.memref_slice %arg6[%52, %c0_i32_19] : memref<64x32xf32, #tpu.memory_space<any>> -> memref<1x32xf32, #tpu.memory_space<any>>
    %c0_i32_20 = arith.constant 0 : i32
    %54 = tpu.memref_slice %arg13[%c6_i32, %c0_i32_20] : memref<8x32xf32, #tpu.memory_space<vmem>> -> memref<1x32xf32, #tpu.memory_space<vmem>>
    %55 = tpu.memref_slice %arg15[%c0_i32_18] : memref<1x!tpu.dma_semaphore, #tpu.memory_space<semaphore_mem>> -> memref<1x!tpu.dma_semaphore, #tpu.memory_space<semaphore_mem>>
    %56 = tpu.memref_squeeze %55 : memref<1x!tpu.dma_semaphore, #tpu.memory_space<semaphore_mem>> -> memref<!tpu.dma_semaphore, #tpu.memory_space<semaphore_mem>>
    tpu.enqueue_dma source(%53 : memref<1x32xf32, #tpu.memory_space<any>>) target(%54 : memref<1x32xf32, #tpu.memory_space<vmem>>) target_semaphore(%56 : memref<!tpu.dma_semaphore, #tpu.memory_space<semaphore_mem>>)
    %c7_i32 = arith.constant 7 : i32
    %57 = arith.addi %0, %c7_i32 : i32
    %58 = arith.index_cast %arg0 : i32 to index
    %59 = arith.index_cast %57 : i32 to index
    %60 = memref.load %arg2[%58, %59] : memref<2x8xi32, #tpu.memory_space<smem>>
    %c0_i32_21 = arith.constant 0 : i32
    %c0_i32_22 = arith.constant 0 : i32
    %61 = tpu.memref_slice %arg6[%60, %c0_i32_22] : memref<64x32xf32, #tpu.memory_space<any>> -> memref<1x32xf32, #tpu.memory_space<any>>
    %c0_i32_23 = arith.constant 0 : i32
    %62 = tpu.memref_slice %arg13[%c7_i32, %c0_i32_23] : memref<8x32xf32, #tpu.memory_space<vmem>> -> memref<1x32xf32, #tpu.memory_space<vmem>>
    %63 = tpu.memref_slice %arg15[%c0_i32_21] : memref<1x!tpu.dma_semaphore, #tpu.memory_space<semaphore_mem>> -> memref<1x!tpu.dma_semaphore, #tpu.memory_space<semaphore_mem>>
    %64 = tpu.memref_squeeze %63 : memref<1x!tpu.dma_semaphore, #tpu.memory_space<semaphore_mem>> -> memref<!tpu.dma_semaphore, #tpu.memory_space<semaphore_mem>>
    tpu.enqueue_dma source(%61 : memref<1x32xf32, #tpu.memory_space<any>>) target(%62 : memref<1x32xf32, #tpu.memory_space<vmem>>) target_semaphore(%64 : memref<!tpu.dma_semaphore, #tpu.memory_space<semaphore_mem>>)
    %c8_i32_24 = arith.constant 8 : i32
    %c0 = arith.constant 0 : index
    %c0_25 = arith.constant 0 : index
    %c0_26 = arith.constant 0 : index
    %65 = vector.load %arg4[%c0, %c0_25, %c0_26] : memref<1x8x1xi32, #tpu.memory_space<vmem>>, vector<1x8x1xi32>
    %66 = vector.shape_cast %65 : vector<1x8x1xi32> to vector<8x1xi32>
    %c0_27 = arith.constant 0 : index
    %c0_28 = arith.constant 0 : index
    %67 = vector.load %arg7[%c0_27, %c0_28] : memref<2x32xf32, #tpu.memory_space<vmem>>, vector<1x32xf32>
    %68 = vector.shape_cast %67 : vector<1x32xf32> to vector<1x32xf32>
    %69 = vector.broadcast %68 : vector<1x32xf32> to vector<8x32xf32>
    %c1 = arith.constant 1 : index
    %c0_29 = arith.constant 0 : index
    %70 = vector.load %arg7[%c1, %c0_29] : memref<2x32xf32, #tpu.memory_space<vmem>>, vector<1x32xf32>
    %71 = vector.shape_cast %70 : vector<1x32xf32> to vector<1x32xf32>
    %72 = vector.broadcast %71 : vector<1x32xf32> to vector<8x32xf32>
    %c1_i32_30 = arith.constant 1 : i32
    %73 = vector.broadcast %c1_i32_30 : i32 to vector<8x1xi32>
    %74 = arith.cmpi eq, %66, %73 : vector<8x1xi32>
    %75 = vector.shape_cast %74 : vector<8x1xi1> to vector<8x1xi1>
    %76 = vector.broadcast %75 : vector<8x1xi1> to vector<8x32xi1>
    %77 = arith.select %76, %72, %69 : vector<8x32xi1>, vector<8x32xf32>
    %c0_31 = arith.constant 0 : index
    %78 = arith.index_cast %0 : i32 to index
    %79 = memref.load %arg3[%c0_31, %78] : memref<1x8xi32, #tpu.memory_space<smem>>
    %80 = arith.index_cast %79 : i32 to index
    %c0_32 = arith.constant 0 : index
    %81 = vector.load %arg8[%80, %c0_32] : memref<16x32xf32, #tpu.memory_space<vmem>>, vector<8x32xf32>
    %c0_i32_33 = arith.constant 0 : i32
    %c0_i32_34 = arith.constant 0 : i32
    %c0_i32_35 = arith.constant 0 : i32
    %c0_i32_36 = arith.constant 0 : i32
    %82 = tpu.memref_slice %arg6[%c0_i32_35, %c0_i32_36] : memref<64x32xf32, #tpu.memory_space<any>> -> memref<1x32xf32, #tpu.memory_space<any>>
    %c0_i32_37 = arith.constant 0 : i32
    %83 = tpu.memref_slice %arg13[%c0_i32_33, %c0_i32_37] : memref<8x32xf32, #tpu.memory_space<vmem>> -> memref<1x32xf32, #tpu.memory_space<vmem>>
    %84 = tpu.memref_slice %arg15[%c0_i32_34] : memref<1x!tpu.dma_semaphore, #tpu.memory_space<semaphore_mem>> -> memref<1x!tpu.dma_semaphore, #tpu.memory_space<semaphore_mem>>
    %85 = tpu.memref_squeeze %84 : memref<1x!tpu.dma_semaphore, #tpu.memory_space<semaphore_mem>> -> memref<!tpu.dma_semaphore, #tpu.memory_space<semaphore_mem>>
    tpu.wait_dma2 semaphore(%85 : memref<!tpu.dma_semaphore, #tpu.memory_space<semaphore_mem>>) src(%82 : memref<1x32xf32, #tpu.memory_space<any>>) dst(%83 : memref<1x32xf32, #tpu.memory_space<vmem>>)
    %c1_i32_38 = arith.constant 1 : i32
    %c0_i32_39 = arith.constant 0 : i32
    %c0_i32_40 = arith.constant 0 : i32
    %c0_i32_41 = arith.constant 0 : i32
    %86 = tpu.memref_slice %arg6[%c0_i32_40, %c0_i32_41] : memref<64x32xf32, #tpu.memory_space<any>> -> memref<1x32xf32, #tpu.memory_space<any>>
    %c0_i32_42 = arith.constant 0 : i32
    %87 = tpu.memref_slice %arg13[%c1_i32_38, %c0_i32_42] : memref<8x32xf32, #tpu.memory_space<vmem>> -> memref<1x32xf32, #tpu.memory_space<vmem>>
    %88 = tpu.memref_slice %arg15[%c0_i32_39] : memref<1x!tpu.dma_semaphore, #tpu.memory_space<semaphore_mem>> -> memref<1x!tpu.dma_semaphore, #tpu.memory_space<semaphore_mem>>
    %89 = tpu.memref_squeeze %88 : memref<1x!tpu.dma_semaphore, #tpu.memory_space<semaphore_mem>> -> memref<!tpu.dma_semaphore, #tpu.memory_space<semaphore_mem>>
    tpu.wait_dma2 semaphore(%89 : memref<!tpu.dma_semaphore, #tpu.memory_space<semaphore_mem>>) src(%86 : memref<1x32xf32, #tpu.memory_space<any>>) dst(%87 : memref<1x32xf32, #tpu.memory_space<vmem>>)
    %c2_i32_43 = arith.constant 2 : i32
    %c0_i32_44 = arith.constant 0 : i32
    %c0_i32_45 = arith.constant 0 : i32
    %c0_i32_46 = arith.constant 0 : i32
    %90 = tpu.memref_slice %arg6[%c0_i32_45, %c0_i32_46] : memref<64x32xf32, #tpu.memory_space<any>> -> memref<1x32xf32, #tpu.memory_space<any>>
    %c0_i32_47 = arith.constant 0 : i32
    %91 = tpu.memref_slice %arg13[%c2_i32_43, %c0_i32_47] : memref<8x32xf32, #tpu.memory_space<vmem>> -> memref<1x32xf32, #tpu.memory_space<vmem>>
    %92 = tpu.memref_slice %arg15[%c0_i32_44] : memref<1x!tpu.dma_semaphore, #tpu.memory_space<semaphore_mem>> -> memref<1x!tpu.dma_semaphore, #tpu.memory_space<semaphore_mem>>
    %93 = tpu.memref_squeeze %92 : memref<1x!tpu.dma_semaphore, #tpu.memory_space<semaphore_mem>> -> memref<!tpu.dma_semaphore, #tpu.memory_space<semaphore_mem>>
    tpu.wait_dma2 semaphore(%93 : memref<!tpu.dma_semaphore, #tpu.memory_space<semaphore_mem>>) src(%90 : memref<1x32xf32, #tpu.memory_space<any>>) dst(%91 : memref<1x32xf32, #tpu.memory_space<vmem>>)
    %c3_i32_48 = arith.constant 3 : i32
    %c0_i32_49 = arith.constant 0 : i32
    %c0_i32_50 = arith.constant 0 : i32
    %c0_i32_51 = arith.constant 0 : i32
    %94 = tpu.memref_slice %arg6[%c0_i32_50, %c0_i32_51] : memref<64x32xf32, #tpu.memory_space<any>> -> memref<1x32xf32, #tpu.memory_space<any>>
    %c0_i32_52 = arith.constant 0 : i32
    %95 = tpu.memref_slice %arg13[%c3_i32_48, %c0_i32_52] : memref<8x32xf32, #tpu.memory_space<vmem>> -> memref<1x32xf32, #tpu.memory_space<vmem>>
    %96 = tpu.memref_slice %arg15[%c0_i32_49] : memref<1x!tpu.dma_semaphore, #tpu.memory_space<semaphore_mem>> -> memref<1x!tpu.dma_semaphore, #tpu.memory_space<semaphore_mem>>
    %97 = tpu.memref_squeeze %96 : memref<1x!tpu.dma_semaphore, #tpu.memory_space<semaphore_mem>> -> memref<!tpu.dma_semaphore, #tpu.memory_space<semaphore_mem>>
    tpu.wait_dma2 semaphore(%97 : memref<!tpu.dma_semaphore, #tpu.memory_space<semaphore_mem>>) src(%94 : memref<1x32xf32, #tpu.memory_space<any>>) dst(%95 : memref<1x32xf32, #tpu.memory_space<vmem>>)
    %c4_i32_53 = arith.constant 4 : i32
    %c0_i32_54 = arith.constant 0 : i32
    %c0_i32_55 = arith.constant 0 : i32
    %c0_i32_56 = arith.constant 0 : i32
    %98 = tpu.memref_slice %arg6[%c0_i32_55, %c0_i32_56] : memref<64x32xf32, #tpu.memory_space<any>> -> memref<1x32xf32, #tpu.memory_space<any>>
    %c0_i32_57 = arith.constant 0 : i32
    %99 = tpu.memref_slice %arg13[%c4_i32_53, %c0_i32_57] : memref<8x32xf32, #tpu.memory_space<vmem>> -> memref<1x32xf32, #tpu.memory_space<vmem>>
    %100 = tpu.memref_slice %arg15[%c0_i32_54] : memref<1x!tpu.dma_semaphore, #tpu.memory_space<semaphore_mem>> -> memref<1x!tpu.dma_semaphore, #tpu.memory_space<semaphore_mem>>
    %101 = tpu.memref_squeeze %100 : memref<1x!tpu.dma_semaphore, #tpu.memory_space<semaphore_mem>> -> memref<!tpu.dma_semaphore, #tpu.memory_space<semaphore_mem>>
    tpu.wait_dma2 semaphore(%101 : memref<!tpu.dma_semaphore, #tpu.memory_space<semaphore_mem>>) src(%98 : memref<1x32xf32, #tpu.memory_space<any>>) dst(%99 : memref<1x32xf32, #tpu.memory_space<vmem>>)
    %c5_i32_58 = arith.constant 5 : i32
    %c0_i32_59 = arith.constant 0 : i32
    %c0_i32_60 = arith.constant 0 : i32
    %c0_i32_61 = arith.constant 0 : i32
    %102 = tpu.memref_slice %arg6[%c0_i32_60, %c0_i32_61] : memref<64x32xf32, #tpu.memory_space<any>> -> memref<1x32xf32, #tpu.memory_space<any>>
    %c0_i32_62 = arith.constant 0 : i32
    %103 = tpu.memref_slice %arg13[%c5_i32_58, %c0_i32_62] : memref<8x32xf32, #tpu.memory_space<vmem>> -> memref<1x32xf32, #tpu.memory_space<vmem>>
    %104 = tpu.memref_slice %arg15[%c0_i32_59] : memref<1x!tpu.dma_semaphore, #tpu.memory_space<semaphore_mem>> -> memref<1x!tpu.dma_semaphore, #tpu.memory_space<semaphore_mem>>
    %105 = tpu.memref_squeeze %104 : memref<1x!tpu.dma_semaphore, #tpu.memory_space<semaphore_mem>> -> memref<!tpu.dma_semaphore, #tpu.memory_space<semaphore_mem>>
    tpu.wait_dma2 semaphore(%105 : memref<!tpu.dma_semaphore, #tpu.memory_space<semaphore_mem>>) src(%102 : memref<1x32xf32, #tpu.memory_space<any>>) dst(%103 : memref<1x32xf32, #tpu.memory_space<vmem>>)
    %c6_i32_63 = arith.constant 6 : i32
    %c0_i32_64 = arith.constant 0 : i32
    %c0_i32_65 = arith.constant 0 : i32
    %c0_i32_66 = arith.constant 0 : i32
    %106 = tpu.memref_slice %arg6[%c0_i32_65, %c0_i32_66] : memref<64x32xf32, #tpu.memory_space<any>> -> memref<1x32xf32, #tpu.memory_space<any>>
    %c0_i32_67 = arith.constant 0 : i32
    %107 = tpu.memref_slice %arg13[%c6_i32_63, %c0_i32_67] : memref<8x32xf32, #tpu.memory_space<vmem>> -> memref<1x32xf32, #tpu.memory_space<vmem>>
    %108 = tpu.memref_slice %arg15[%c0_i32_64] : memref<1x!tpu.dma_semaphore, #tpu.memory_space<semaphore_mem>> -> memref<1x!tpu.dma_semaphore, #tpu.memory_space<semaphore_mem>>
    %109 = tpu.memref_squeeze %108 : memref<1x!tpu.dma_semaphore, #tpu.memory_space<semaphore_mem>> -> memref<!tpu.dma_semaphore, #tpu.memory_space<semaphore_mem>>
    tpu.wait_dma2 semaphore(%109 : memref<!tpu.dma_semaphore, #tpu.memory_space<semaphore_mem>>) src(%106 : memref<1x32xf32, #tpu.memory_space<any>>) dst(%107 : memref<1x32xf32, #tpu.memory_space<vmem>>)
    %c7_i32_68 = arith.constant 7 : i32
    %c0_i32_69 = arith.constant 0 : i32
    %c0_i32_70 = arith.constant 0 : i32
    %c0_i32_71 = arith.constant 0 : i32
    %110 = tpu.memref_slice %arg6[%c0_i32_70, %c0_i32_71] : memref<64x32xf32, #tpu.memory_space<any>> -> memref<1x32xf32, #tpu.memory_space<any>>
    %c0_i32_72 = arith.constant 0 : i32
    %111 = tpu.memref_slice %arg13[%c7_i32_68, %c0_i32_72] : memref<8x32xf32, #tpu.memory_space<vmem>> -> memref<1x32xf32, #tpu.memory_space<vmem>>
    %112 = tpu.memref_slice %arg15[%c0_i32_69] : memref<1x!tpu.dma_semaphore, #tpu.memory_space<semaphore_mem>> -> memref<1x!tpu.dma_semaphore, #tpu.memory_space<semaphore_mem>>
    %113 = tpu.memref_squeeze %112 : memref<1x!tpu.dma_semaphore, #tpu.memory_space<semaphore_mem>> -> memref<!tpu.dma_semaphore, #tpu.memory_space<semaphore_mem>>
    tpu.wait_dma2 semaphore(%113 : memref<!tpu.dma_semaphore, #tpu.memory_space<semaphore_mem>>) src(%110 : memref<1x32xf32, #tpu.memory_space<any>>) dst(%111 : memref<1x32xf32, #tpu.memory_space<vmem>>)
    %c8_i32_73 = arith.constant 8 : i32
    %c0_74 = arith.constant 0 : index
    %c0_75 = arith.constant 0 : index
    %c0_76 = arith.constant 0 : index
    %114 = vector.load %arg5[%c0_74, %c0_75, %c0_76] : memref<1x8x1xf32, #tpu.memory_space<vmem>>, vector<1x8x1xf32>
    %115 = vector.shape_cast %114 : vector<1x8x1xf32> to vector<8x1xf32>
    %c0_77 = arith.constant 0 : index
    %c0_78 = arith.constant 0 : index
    %116 = vector.load %arg13[%c0_77, %c0_78] : memref<8x32xf32, #tpu.memory_space<vmem>>, vector<8x32xf32>
    %117 = vector.broadcast %115 : vector<8x1xf32> to vector<8x32xf32>
    %118 = arith.mulf %116, %117 : vector<8x32xf32>
    %119 = arith.addf %118, %77 : vector<8x32xf32>
    %120 = arith.addf %119, %81 : vector<8x32xf32>
    %cst = arith.constant dense<0.000000e+00> : vector<8xf32>
    %121 = vector.multi_reduction <add>, %120, %cst [1] : vector<8x32xf32> to vector<8xf32>
    %122 = vector.shape_cast %121 : vector<8xf32> to vector<8x1xf32>
    %cst_79 = arith.constant 3.200000e+01 : f32
    %123 = vector.broadcast %cst_79 : f32 to vector<8x1xf32>
    %124 = arith.divf %122, %123 : vector<8x1xf32>
    %125 = vector.broadcast %124 : vector<8x1xf32> to vector<8x32xf32>
    %126 = arith.subf %120, %125 : vector<8x32xf32>
    %127 = arith.mulf %126, %126 : vector<8x32xf32>
    %cst_80 = arith.constant dense<0.000000e+00> : vector<8xf32>
    %128 = vector.multi_reduction <add>, %127, %cst_80 [1] : vector<8x32xf32> to vector<8xf32>
    %129 = vector.shape_cast %128 : vector<8xf32> to vector<8x1xf32>
    %cst_81 = arith.constant 3.200000e+01 : f32
    %130 = vector.broadcast %cst_81 : f32 to vector<8x1xf32>
    %131 = arith.divf %129, %130 : vector<8x1xf32>
    %cst_82 = arith.constant 9.99999996E-13 : f32
    %132 = vector.broadcast %cst_82 : f32 to vector<8x1xf32>
    %133 = arith.addf %131, %132 : vector<8x1xf32>
    %134 = math.rsqrt %133 : vector<8x1xf32>
    %135 = vector.broadcast %134 : vector<8x1xf32> to vector<8x32xf32>
    %136 = arith.mulf %126, %135 : vector<8x32xf32>
    %c0_83 = arith.constant 0 : index
    %c0_84 = arith.constant 0 : index
    %137 = vector.load %arg9[%c0_83, %c0_84] : memref<1x32xf32, #tpu.memory_space<vmem>>, vector<1x32xf32>
    %138 = vector.broadcast %137 : vector<1x32xf32> to vector<8x32xf32>
    %139 = arith.mulf %136, %138 : vector<8x32xf32>
    %c0_85 = arith.constant 0 : index
    %c0_86 = arith.constant 0 : index
    %140 = vector.load %arg10[%c0_85, %c0_86] : memref<1x32xf32, #tpu.memory_space<vmem>>, vector<1x32xf32>
    %141 = vector.broadcast %140 : vector<1x32xf32> to vector<8x32xf32>
    %142 = arith.addf %139, %141 : vector<8x32xf32>
    %c0_87 = arith.constant 0 : index
    %c0_88 = arith.constant 0 : index
    %c0_89 = arith.constant 0 : index
    %143 = vector.load %arg11[%c0_87, %c0_88, %c0_89] : memref<1x8x32xf32, #tpu.memory_space<vmem>>, vector<1x8x32xf32>
    %144 = vector.shape_cast %143 : vector<1x8x32xf32> to vector<8x32xf32>
    %145 = vector.shape_cast %142 : vector<8x32xf32> to vector<1x8x32xf32>
    tpu.vector_store %arg11[%c0_87, %c0_88, %c0_89], %145 {strides = array<i32>} : memref<1x8x32xf32, #tpu.memory_space<vmem>>, vector<1x8x32xf32>,
    %c0_90 = arith.constant 0 : index
    %c0_91 = arith.constant 0 : index
    %c0_92 = arith.constant 0 : index
    %146 = vector.load %arg12[%c0_90, %c0_91, %c0_92] : memref<1x8x32xf32, #tpu.memory_space<vmem>>, vector<1x8x32xf32>
    %147 = vector.shape_cast %146 : vector<1x8x32xf32> to vector<8x32xf32>
    %148 = vector.shape_cast %118 : vector<8x32xf32> to vector<1x8x32xf32>
    tpu.vector_store %arg12[%c0_90, %c0_91, %c0_92], %148 {strides = array<i32>} : memref<1x8x32xf32, #tpu.memory_space<vmem>>, vector<1x8x32xf32>,
    return
  }
  func.func @transform_0(%arg0: i32, %arg1: i32, %arg2: memref<2x8xi32, #tpu.memory_space<smem>>, %arg3: memref<1x8xi32, #tpu.memory_space<smem>>) -> (i32, i32, i32) {
    %c0_i32 = arith.constant 0 : i32
    %c0_i32_0 = arith.constant 0 : i32
    return %arg0, %arg1, %c0_i32 : i32, i32, i32
  }
  func.func @transform_1(%arg0: i32, %arg1: i32, %arg2: memref<2x8xi32, #tpu.memory_space<smem>>, %arg3: memref<1x8xi32, #tpu.memory_space<smem>>) -> (i32, i32, i32) {
    %c0_i32 = arith.constant 0 : i32
    %c0_i32_0 = arith.constant 0 : i32
    return %arg0, %arg1, %c0_i32 : i32, i32, i32
  }
  func.func @transform_3(%arg0: i32, %arg1: i32, %arg2: memref<2x8xi32, #tpu.memory_space<smem>>, %arg3: memref<1x8xi32, #tpu.memory_space<smem>>) -> (i32, i32) {
    %c0_i32 = arith.constant 0 : i32
    %c0_i32_0 = arith.constant 0 : i32
    %c0_i32_1 = arith.constant 0 : i32
    return %c0_i32, %c0_i32_0 : i32, i32
  }
  func.func @transform_4(%arg0: i32, %arg1: i32, %arg2: memref<2x8xi32, #tpu.memory_space<smem>>, %arg3: memref<1x8xi32, #tpu.memory_space<smem>>) -> (i32, i32) {
    %c0_i32 = arith.constant 0 : i32
    %c0_i32_0 = arith.constant 0 : i32
    %c0_i32_1 = arith.constant 0 : i32
    return %c0_i32, %c0_i32_0 : i32, i32
  }
  func.func @transform_5(%arg0: i32, %arg1: i32, %arg2: memref<2x8xi32, #tpu.memory_space<smem>>, %arg3: memref<1x8xi32, #tpu.memory_space<smem>>) -> (i32, i32) {
    %c0_i32 = arith.constant 0 : i32
    %c0_i32_0 = arith.constant 0 : i32
    %c0_i32_1 = arith.constant 0 : i32
    return %c0_i32, %c0_i32_0 : i32, i32
  }
  func.func @transform_6(%arg0: i32, %arg1: i32, %arg2: memref<2x8xi32, #tpu.memory_space<smem>>, %arg3: memref<1x8xi32, #tpu.memory_space<smem>>) -> (i32, i32) {
    %c0_i32 = arith.constant 0 : i32
    %c0_i32_0 = arith.constant 0 : i32
    %c0_i32_1 = arith.constant 0 : i32
    return %c0_i32, %c0_i32_0 : i32, i32
  }
  func.func @transform_7(%arg0: i32, %arg1: i32, %arg2: memref<2x8xi32, #tpu.memory_space<smem>>, %arg3: memref<1x8xi32, #tpu.memory_space<smem>>) -> (i32, i32, i32) {
    %c0_i32 = arith.constant 0 : i32
    %c0_i32_0 = arith.constant 0 : i32
    return %arg0, %arg1, %c0_i32 : i32, i32, i32
  }
  func.func @transform_8(%arg0: i32, %arg1: i32, %arg2: memref<2x8xi32, #tpu.memory_space<smem>>, %arg3: memref<1x8xi32, #tpu.memory_space<smem>>) -> (i32, i32, i32) {
    %c0_i32 = arith.constant 0 : i32
    %c0_i32_0 = arith.constant 0 : i32
    return %arg0, %arg1, %c0_i32 : i32, i32, i32
  }
}

</mosaic_0001>

<llo_original>
// kernel: tpu_custom_call.1
$region0: #{tpu_custom_call.1}
  #allocation0 [shape = 'u32[]', space=smem, size = 0x4, offset = 0x4, fixed_abs, tag = 'smem constant byte address 0x4 - core index']
  #allocation1 [shape = 'u32[144,128]{1,0:T(1,128)}', space=vmem, size = 0x12000, scoped, tag = 'internal scratch']
  #allocation2 [shape = 'f32[8,32]{1,0:T(8,128)}', space=vmem, size = 0x1000, scoped, tag = 'scratch operand']
  #allocation3 [shape = 'f32[8,32]{1,0:T(8,128)}', space=vmem, size = 0x1000, scoped, tag = 'scratch operand']
  #allocation4 [shape = 's32[1]{0}', space=sflag, size = 0x4, scoped, tag = 'scratch operand']
  #allocation5 [shape = 's32[1]{0}', space=sflag, size = 0x4, scoped, tag = 'scoped memory for tpu_custom_call.1']
  #allocation6 [shape = 'u8[1024]{0}', space=smem, size = 0x400, scoped, tag = 'prefetched SMEM operand 0']
  #allocation7 [shape = 'u8[512]{0}', space=smem, size = 0x200, scoped, tag = 'prefetched SMEM operand 1']
  #allocation12 [shape = 's32[]', space=sflag, size = 0x4, offset = 0, fixed_abs, tag = 'sflag constant byte address 0x0 - dummy sync flag']
  #allocation13 [shape = 's32[]', space=sflag, size = 0x4, offset = 0, fixed_abs, tag = 'sflag constant byte address 0x0 - dummy sync flag']
  #allocation14 [shape = 's32[]', space=sflag, size = 0x4, offset = 0, fixed_abs, tag = 'sflag constant byte address 0x0 - dummy sync flag']
  #allocation15 [shape = 's32[]', space=sflag, size = 0x4, offset = 0, fixed_abs, tag = 'sflag constant byte address 0x0 - dummy sync flag']
  #allocation16 [shape = 's32[]', space=sflag, size = 0x4, offset = 0, fixed_abs, tag = 'sflag constant byte address 0x0 - dummy sync flag']
  #allocation17 [shape = 's32[]', space=sflag, size = 0x4, offset = 0, fixed_abs, tag = 'sflag constant byte address 0x0 - dummy sync flag']
  #allocation18 [shape = 's32[]', space=sflag, size = 0x4, offset = 0, fixed_abs, tag = 'sflag constant byte address 0x0 - dummy sync flag']
  #allocation19 [shape = 's32[]', space=sflag, size = 0x4, offset = 0, fixed_abs, tag = 'sflag constant byte address 0x0 - dummy sync flag']
  %s0 = inlined_call_operand.vmem [shape: s32[2,8], index: 0, kind: input, shape index: {}]
  %s1 = inlined_call_operand.vmem [shape: s32[1,8], index: 1, kind: input, shape index: {}]
  %s2 = inlined_call_operand.vmem [shape: s32[2,8,1], index: 2, kind: input, shape index: {}]
  %s3 = inlined_call_operand.vmem [shape: f32[2,8,1], index: 3, kind: input, shape index: {}]
  %s4 = inlined_call_operand.vmem [shape: f32[64,32], index: 4, kind: input, shape index: {}]
  %s5 = inlined_call_operand.vmem [shape: f32[2,32], index: 5, kind: input, shape index: {}]
  %s6 = inlined_call_operand.vmem [shape: f32[16,32], index: 6, kind: input, shape index: {}]
  %s7 = inlined_call_operand.vmem [shape: f32[1,32], index: 7, kind: input, shape index: {}]
  %s8 = inlined_call_operand.vmem [shape: f32[1,32], index: 8, kind: input, shape index: {}]
  %s9 = inlined_call_operand.hbm [shape: f32[2,8,32], index: 9, kind: output, shape index: {0}]
  %s10 = inlined_call_operand.hbm [shape: f32[2,8,32], index: 10, kind: output, shape index: {1}]
  %11 = xla_tuple %s9, %s10
  %s12 = sld [smem:[#allocation0]]
  $region305: #{tpu_custom_call.1} parent=0
    _
  %s14 = ssub.s32 1, %s12
  %s15 = scalar_select 0, %s14, %s12
  %s16 = sshll.u32 %s0, 4
  %s17 = int_to_ptr.vmem [resolvable:$true] %s16
  %19 = dma.vmem_to_smem %s17, 32, [#allocation6], [#allocation5]
  %s20 = sshll.u32 %s1, 4
  %s21 = int_to_ptr.vmem [resolvable:$true] %s20
  %23 = dma.vmem_to_smem %s21, 16, [#allocation7], [#allocation5]
  %24 = dma.done [#allocation5], 48
  %25 = sfence
  $region1: #{tpu_custom_call.1} parent=0
    #allocation8 [shape = 'u8[8192]{0}', space=vmem, size = 0x2000, scoped, tag = 'output window, operand 0']
    #allocation9 [shape = 's32[2]{0}', space=sflag, size = 0x8, scoped, tag = 'scoped memory for tpu_custom_call.1']
    #allocation10 [shape = 'u8[8192]{0}', space=vmem, size = 0x2000, scoped, tag = 'output window, operand 1']
    #allocation11 [shape = 's32[2]{0}', space=sflag, size = 0x8, scoped, tag = 'scoped memory for tpu_custom_call.1']
    %26 = vsyncpa [#allocation9], 0
    %s27 = scalar_lea.sflag [#allocation9], 1
    %28 = vsyncpa %s27, 0
    %29 = vsyncpa [#allocation11], 0
    %s30 = scalar_lea.sflag [#allocation11], 1
    %31 = vsyncpa %s30, 0
    loop: start=0, step=1, limit=4
    $region2: #{tpu_custom_call.1} parent=1 // loop_pre_header
      _
    $region3: #{tpu_custom_call.1} parent=1 // loop_header
      %s33 = sphi 0, %s37
      %p34 = scmp.ge.s32.totalorder %s33, 4
      %s40 = sphi 0, %s52
      %s41 = sphi 0, %s48
      %s42 = sphi 0, %s40
      %s43 = sphi 0, %s41
      %s44 = sphi 0, %s42
      %s45 = sphi 0, %s43
      %s57 = sphi 0, %s59
      %s60 = sphi 0, %s57
      %s61 = sphi 0, %s60
      %s77 = sphi 0, %s61
      %s85 = sphi 0, %s87
      %s88 = sphi 0, %s85
      %s89 = sphi 0, %s88
      %s105 = sphi 0, %s89
      %s109 = sphi 0, %s109
      %s111 = sphi 0, %s109
      %s112 = sphi 0, %s111
      %s126 = sphi 0, %s112
      %s130 = sphi 0, %s130
      %s132 = sphi 0, %s130
      %s133 = sphi 0, %s132
      %s147 = sphi 0, %s133
      %s151 = sphi 0, %s151
      %s153 = sphi 0, %s151
      %s154 = sphi 0, %s153
      %s168 = sphi 0, %s154
      %s172 = sphi 0, %s172
      %s174 = sphi 0, %s172
      %s175 = sphi 0, %s174
      %s189 = sphi 0, %s175
      %s197 = sphi 0, %s199
      %s200 = sphi 0, %s197
      %s201 = sphi 0, %s200
      %s217 = sphi 0, %s201
      %s225 = sphi 0, %s227
      %s228 = sphi 0, %s225
      %s229 = sphi 0, %s228
      %s245 = sphi 0, %s229
    $region4: #{tpu_custom_call.1} parent=1 // loop_header_branch
      %36 = sbr.rel (%p34) target = $region8
    $region5: #{tpu_custom_call.1} parent=1 // loop_body
      %s38 = ssub.s32 %s33, 1
      %s39 = ssub.s32 %s33, 2
      %s46 = sadd.s32 1, %s41
      %p47 = scmp.ge.s32.totalorder %s46, 1
      %s48 = scalar_select %p47, 0, %s46
      %s49 = sadd.s32 1, %s40
      %s50 = scalar_select %p47, %s49, %s40
      %p51 = scmp.ge.s32.totalorder %s50, 2
      %s52 = scalar_select %p51, 0, %s50
      %s53 = ssub.s32 %s40, %s52
      %s54 = ssub.s32 %s41, %s48
      %s55 = sor.u32 %s53, %s54
      %p56 = scmp.eq.s32.totalorder %s55, 0
      %s58 = sadd.s32 %s57, 1
      %s59 = scalar_select %p56, %s57, %s58
      %p62 = pneg %p56
      %p63 = scmp.eq.s32.totalorder %s33, 1
      %p64 = por %p62, %p63
      %p65 = scmp.ne.s32.totalorder %s57, %s60
      %p66 = scmp.eq.s32.totalorder %s33, 0
      %p67 = por %p65, %p66
      %p68 = scmp.ne.s32.totalorder %s57, %s60
      %p69 = scmp.eq.s32.totalorder %s38, 1
      %p70 = por %p68, %p69
      %p71 = scmp.ne.s32.totalorder %s60, %s61
      %p72 = scmp.eq.s32.totalorder %s38, 0
      %p73 = por %p71, %p72
      %p74 = scmp.ne.s32.totalorder %s60, %s61
      %p75 = scmp.eq.s32.totalorder %s39, 1
      %p76 = por %p74, %p75
      %p78 = scmp.ne.s32.totalorder %s61, %s77
      %p79 = scmp.eq.s32.totalorder %s39, 0
      %p80 = por %p78, %p79
      %s81 = ssub.s32 %s40, %s52
      %s82 = ssub.s32 %s41, %s48
      %s83 = sor.u32 %s81, %s82
      %p84 = scmp.eq.s32.totalorder %s83, 0
      %s86 = sadd.s32 %s85, 1
      %s87 = scalar_select %p84, %s85, %s86
      %p90 = pneg %p84
      %p91 = scmp.eq.s32.totalorder %s33, 1
      %p92 = por %p90, %p91
      %p93 = scmp.ne.s32.totalorder %s85, %s88
      %p94 = scmp.eq.s32.totalorder %s33, 0
      %p95 = por %p93, %p94
      %p96 = scmp.ne.s32.totalorder %s85, %s88
      %p97 = scmp.eq.s32.totalorder %s38, 1
      %p98 = por %p96, %p97
      %p99 = scmp.ne.s32.totalorder %s88, %s89
      %p100 = scmp.eq.s32.totalorder %s38, 0
      %p101 = por %p99, %p100
      %p102 = scmp.ne.s32.totalorder %s88, %s89
      %p103 = scmp.eq.s32.totalorder %s39, 1
      %p104 = por %p102, %p103
      %p106 = scmp.ne.s32.totalorder %s89, %s105
      %p107 = scmp.eq.s32.totalorder %s39, 0
      %p108 = por %p106, %p107
      %s110 = sadd.s32 %s109, 1
      %p113 = scmp.eq.s32.totalorder %s33, 1
      %p114 = scmp.ne.s32.totalorder %s109, %s111
      %p115 = scmp.eq.s32.totalorder %s33, 0
      %p116 = por %p114, %p115
      %p117 = scmp.ne.s32.totalorder %s109, %s111
      %p118 = scmp.eq.s32.totalorder %s38, 1
      %p119 = por %p117, %p118
      %p120 = scmp.ne.s32.totalorder %s111, %s112
      %p121 = scmp.eq.s32.totalorder %s38, 0
      %p122 = por %p120, %p121
      %p123 = scmp.ne.s32.totalorder %s111, %s112
      %p124 = scmp.eq.s32.totalorder %s39, 1
      %p125 = por %p123, %p124
      %p127 = scmp.ne.s32.totalorder %s112, %s126
      %p128 = scmp.eq.s32.totalorder %s39, 0
      %p129 = por %p127, %p128
      %s131 = sadd.s32 %s130, 1
      %p134 = scmp.eq.s32.totalorder %s33, 1
      %p135 = scmp.ne.s32.totalorder %s130, %s132
      %p136 = scmp.eq.s32.totalorder %s33, 0
      %p137 = por %p135, %p136
      %p138 = scmp.ne.s32.totalorder %s130, %s132
      %p139 = scmp.eq.s32.totalorder %s38, 1
      %p140 = por %p138, %p139
      %p141 = scmp.ne.s32.totalorder %s132, %s133
      %p142 = scmp.eq.s32.totalorder %s38, 0
      %p143 = por %p141, %p142
      %p144 = scmp.ne.s32.totalorder %s132, %s133
      %p145 = scmp.eq.s32.totalorder %s39, 1
      %p146 = por %p144, %p145
      %p148 = scmp.ne.s32.totalorder %s133, %s147
      %p149 = scmp.eq.s32.totalorder %s39, 0
      %p150 = por %p148, %p149
      %s152 = sadd.s32 %s151, 1
      %p155 = scmp.eq.s32.totalorder %s33, 1
      %p156 = scmp.ne.s32.totalorder %s151, %s153
      %p157 = scmp.eq.s32.totalorder %s33, 0
      %p158 = por %p156, %p157
      %p159 = scmp.ne.s32.totalorder %s151, %s153
      %p160 = scmp.eq.s32.totalorder %s38, 1
      %p161 = por %p159, %p160
      %p162 = scmp.ne.s32.totalorder %s153, %s154
      %p163 = scmp.eq.s32.totalorder %s38, 0
      %p164 = por %p162, %p163
      %p165 = scmp.ne.s32.totalorder %s153, %s154
      %p166 = scmp.eq.s32.totalorder %s39, 1
      %p167 = por %p165, %p166
      %p169 = scmp.ne.s32.totalorder %s154, %s168
      %p170 = scmp.eq.s32.totalorder %s39, 0
      %p171 = por %p169, %p170
      %s173 = sadd.s32 %s172, 1
      %p176 = scmp.eq.s32.totalorder %s33, 1
      %p177 = scmp.ne.s32.totalorder %s172, %s174
      %p178 = scmp.eq.s32.totalorder %s33, 0
      %p179 = por %p177, %p178
      %p180 = scmp.ne.s32.totalorder %s172, %s174
      %p181 = scmp.eq.s32.totalorder %s38, 1
      %p182 = por %p180, %p181
      %p183 = scmp.ne.s32.totalorder %s174, %s175
      %p184 = scmp.eq.s32.totalorder %s38, 0
      %p185 = por %p183, %p184
      %p186 = scmp.ne.s32.totalorder %s174, %s175
      %p187 = scmp.eq.s32.totalorder %s39, 1
      %p188 = por %p186, %p187
      %p190 = scmp.ne.s32.totalorder %s175, %s189
      %p191 = scmp.eq.s32.totalorder %s39, 0
      %p192 = por %p190, %p191
      %s193 = ssub.s32 %s40, %s52
      %s194 = ssub.s32 %s41, %s48
      %s195 = sor.u32 %s193, %s194
      %p196 = scmp.eq.s32.totalorder %s195, 0
      %s198 = sadd.s32 %s197, 1
      %s199 = scalar_select %p196, %s197, %s198
      %p202 = pneg %p196
      %p203 = scmp.eq.s32.totalorder %s33, 1
      %p204 = por %p202, %p203
      %p205 = scmp.ne.s32.totalorder %s197, %s200
      %p206 = scmp.eq.s32.totalorder %s33, 0
      %p207 = por %p205, %p206
      %p208 = scmp.ne.s32.totalorder %s197, %s200
      %p209 = scmp.eq.s32.totalorder %s38, 1
      %p210 = por %p208, %p209
      %p211 = scmp.ne.s32.totalorder %s200, %s201
      %p212 = scmp.eq.s32.totalorder %s38, 0
      %p213 = por %p211, %p212
      %p214 = scmp.ne.s32.totalorder %s200, %s201
      %p215 = scmp.eq.s32.totalorder %s39, 1
      %p216 = por %p214, %p215
      %p218 = scmp.ne.s32.totalorder %s201, %s217
      %p219 = scmp.eq.s32.totalorder %s39, 0
      %p220 = por %p218, %p219
      %s221 = ssub.s32 %s40, %s52
      %s222 = ssub.s32 %s41, %s48
      %s223 = sor.u32 %s221, %s222
      %p224 = scmp.eq.s32.totalorder %s223, 0
      %s226 = sadd.s32 %s225, 1
      %s227 = scalar_select %p224, %s225, %s226
      %p230 = pneg %p224
      %p231 = scmp.eq.s32.totalorder %s33, 1
      %p232 = por %p230, %p231
      %p233 = scmp.ne.s32.totalorder %s225, %s228
      %p234 = scmp.eq.s32.totalorder %s33, 0
      %p235 = por %p233, %p234
      %p236 = scmp.ne.s32.totalorder %s225, %s228
      %p237 = scmp.eq.s32.totalorder %s38, 1
      %p238 = por %p236, %p237
      %p239 = scmp.ne.s32.totalorder %s228, %s229
      %p240 = scmp.eq.s32.totalorder %s38, 0
      %p241 = por %p239, %p240
      %p242 = scmp.ne.s32.totalorder %s228, %s229
      %p243 = scmp.eq.s32.totalorder %s39, 1
      %p244 = por %p242, %p243
      %p246 = scmp.ne.s32.totalorder %s229, %s245
      %p247 = scmp.eq.s32.totalorder %s39, 0
      %p248 = por %p246, %p247
      %p249 = scmp.le.s32.totalorder 1, %s33
      %p250 = scmp.lt.s32.totalorder %s33, 3
      %p251 = pnand %p249, %p250
      %p252 = pneg %p251
      // Predicated region
      $region9: #{tpu_custom_call.1} parent=5 // pred_check
        _
      $region10: #{tpu_custom_call.1} parent=5 // pred_check_branch
        %254 = sbr.rel (%p251) target = $region12
      $region11: #{tpu_custom_call.1} parent=5 // pred_region
        %s255 = ssub.s32 %s33, 1
        // Predicated region
        $region13: #{tpu_custom_call.1} parent=11 // pred_check
          %p256 = pneg %p122
        $region14: #{tpu_custom_call.1} parent=11 // pred_check_branch
          %258 = sbr.rel (%p256) target = $region16
        $region15: #{tpu_custom_call.1} parent=11 // pred_region
          _
        $region16: #{tpu_custom_call.1} parent=11 // pred_fallthru
          _
        // Predicated region
        $region17: #{tpu_custom_call.1} parent=11 // pred_check
          %p259 = pneg %p143
        $region18: #{tpu_custom_call.1} parent=11 // pred_check_branch
          %261 = sbr.rel (%p259) target = $region20
        $region19: #{tpu_custom_call.1} parent=11 // pred_region
          _
        $region20: #{tpu_custom_call.1} parent=11 // pred_fallthru
          _
        // Predicated region
        $region21: #{tpu_custom_call.1} parent=11 // pred_check
          %p262 = pneg %p164
        $region22: #{tpu_custom_call.1} parent=11 // pred_check_branch
          %264 = sbr.rel (%p262) target = $region24
        $region23: #{tpu_custom_call.1} parent=11 // pred_region
          _
        $region24: #{tpu_custom_call.1} parent=11 // pred_fallthru
          _
        // Predicated region
        $region25: #{tpu_custom_call.1} parent=11 // pred_check
          %p265 = pneg %p185
        $region26: #{tpu_custom_call.1} parent=11 // pred_check_branch
          %267 = sbr.rel (%p265) target = $region28
        $region27: #{tpu_custom_call.1} parent=11 // pred_region
          _
        $region28: #{tpu_custom_call.1} parent=11 // pred_fallthru
          _
      $region12: #{tpu_custom_call.1} parent=5 // pred_fallthru
        _
      %p268 = scmp.lt.s32.totalorder %s33, 2
      // Predicated region
      $region29: #{tpu_custom_call.1} parent=5 // pred_check
        %p269 = pneg %p268
      $region30: #{tpu_custom_call.1} parent=5 // pred_check_branch
        %271 = sbr.rel (%p269) target = $region32
      $region31: #{tpu_custom_call.1} parent=5 // pred_region
        // Predicated region
        $region33: #{tpu_custom_call.1} parent=31 // pred_check
          %p272 = pneg %p67
        $region34: #{tpu_custom_call.1} parent=31 // pred_check_branch
          %274 = sbr.rel (%p272) target = $region36
        $region35: #{tpu_custom_call.1} parent=31 // pred_region
          %p275 = scmp.lt.s32.totalorder %s40, 1
          %s276 = scalar_select %p275, %s40, 1
          %p277 = scmp.lt.s32.totalorder %s41, 0
          %s278 = scalar_select %p277, %s41, 0
          %s279 = sadd.s32 %s278, %s276
          %s280 = smul.addr %s279, 8
          %s281 = scalar_lea.vmem %s2, %s280
        $region36: #{tpu_custom_call.1} parent=31 // pred_fallthru
          _
        // Predicated region
        $region37: #{tpu_custom_call.1} parent=31 // pred_check
          %p282 = pneg %p95
        $region38: #{tpu_custom_call.1} parent=31 // pred_check_branch
          %284 = sbr.rel (%p282) target = $region40
        $region39: #{tpu_custom_call.1} parent=31 // pred_region
          %p285 = scmp.lt.s32.totalorder %s40, 1
          %s286 = scalar_select %p285, %s40, 1
          %p287 = scmp.lt.s32.totalorder %s41, 0
          %s288 = scalar_select %p287, %s41, 0
          %s289 = sadd.s32 %s288, %s286
          %s290 = smul.addr %s289, 8
          %s291 = scalar_lea.vmem %s3, %s290
        $region40: #{tpu_custom_call.1} parent=31 // pred_fallthru
          _
      $region32: #{tpu_custom_call.1} parent=5 // pred_fallthru
        _
      %p292 = scmp.le.s32.totalorder 1, %s33
      %p293 = scmp.lt.s32.totalorder %s33, 3
      %p294 = pnand %p292, %p293
      %p295 = pneg %p294
      // Predicated region
      $region41: #{tpu_custom_call.1} parent=5 // pred_check
        _
      $region42: #{tpu_custom_call.1} parent=5 // pred_check_branch
        %297 = sbr.rel (%p294) target = $region44
      $region43: #{tpu_custom_call.1} parent=5 // pred_region
        %s298 = ssub.s32 %s33, 1
        %p299 = scmp.lt.s32.totalorder %s42, 1
        %s300 = scalar_select %p299, %s42, 1
        %p301 = scmp.lt.s32.totalorder %s43, 0
        %s302 = scalar_select %p301, %s43, 0
        %s303 = sadd.s32 %s302, %s300
        %s304 = smul.addr %s303, 8
        %s305 = scalar_lea.vmem %s2, %s304
        %p306 = pneg %p73
        %p307 = pneg %p70
        %p308 = scmp.lt.s32.totalorder %s42, 1
        %s309 = scalar_select %p308, %s42, 1
        %p310 = scmp.lt.s32.totalorder %s43, 0
        %s311 = scalar_select %p310, %s43, 0
        %s312 = sadd.s32 %s311, %s309
        %s313 = smul.addr %s312, 8
        %s314 = scalar_lea.vmem %s3, %s313
        %p315 = pneg %p101
        %p316 = pneg %p98
        %p317 = pneg %p122
        %p318 = pneg %p119
        %p319 = pneg %p143
        %p320 = pneg %p140
        %p321 = pneg %p164
        %p322 = pneg %p161
        %p323 = pneg %p185
        %p324 = pneg %p182
        %p325 = pneg %p213
        %p326 = pneg %p210
        %s327 = sand.u32 %s200, 1
        %s328 = scalar_lea.sflag [#allocation9], %s327
        %s329 = sand.u32 %s200, 1
        %s330 = smul.addr %s329, 8
        %s331 = scalar_lea.vmem [#allocation8], %s330
        %p332 = pneg %p241
        %p333 = pneg %p238
        %s334 = sand.u32 %s228, 1
        %s335 = scalar_lea.sflag [#allocation11], %s334
        %s336 = sand.u32 %s228, 1
        %s337 = smul.addr %s336, 8
        %s338 = scalar_lea.vmem [#allocation10], %s337
        %p339 = scmp.lt.s32.totalorder %s42, 1
        %s340 = scalar_select %p339, %s42, 1
        %p341 = scmp.lt.s32.totalorder %s43, 0
        %s342 = scalar_select %p341, %s43, 0
        %s343 = sadd.s32 %s342, %s340
        %s344 = smul.addr %s343, 8
        %s345 = scalar_lea.vmem %s2, %s344
        %p346 = scmp.lt.s32.totalorder %s42, 1
        %s347 = scalar_select %p346, %s42, 1
        %p348 = scmp.lt.s32.totalorder %s43, 0
        %s349 = scalar_select %p348, %s43, 0
        %s350 = sadd.s32 %s349, %s347
        %s351 = smul.addr %s350, 8
        %s352 = scalar_lea.vmem %s3, %s351
        %s353 = smul.u32 %s43, 8
        %s354 = sshra.s32 %s353, 7
        %s355 = sand.u32 %s353, 127
        %s356 = sadd.s32 %s354, %s42
        %s357 = smul.u32 %s356, 128
        %s358 = sshra.s32 %s353, 7
        %s359 = sand.u32 %s353, 127
        %s360 = sadd.s32 %s357, %s359
        %s361 = sld [smem:[#allocation6 + %s360]]
        %s362 = scalar_lea.vmem %s4, %s361
        %p364 = scmp.lt.u32.totalorder 1, 8
        %p365 = pneg %p364
        // Predicated region
        $region45: #{tpu_custom_call.1} parent=43 // pred_check
          _
        $region46: #{tpu_custom_call.1} parent=43 // pred_check_branch
          %367 = sbr.rel (%p364) target = $region48
        $region47: #{tpu_custom_call.1} parent=43 // pred_region
          %s382 = sand.u32 1, 7
          %p383 = scmp.eq.s32.totalorder %s382, 0
          %p384 = pneg %p383
          // Predicated region
          $region60: #{tpu_custom_call.1} parent=47 // pred_check
            _
          $region61: #{tpu_custom_call.1} parent=47 // pred_check_branch
            %386 = sbr.rel (%p383) target = $region63
          $region62: #{tpu_custom_call.1} parent=47 // pred_region
            %s387 = sand.u32 1, 7
            %s388 = ssub.s32 1, %s387
            %s389 = scalar_lea.vmem %s362, %s388
            %s390 = ssub.s32 1, %s387
            %s391 = scalar_lea.vmem [#allocation2], %s390
            %s392 = sshllo.u32 0, %s387
            loop: start=0, step=1, limit=1
            $region64: #{tpu_custom_call.1} parent=62 // loop_pre_header
              _
            $region65: #{tpu_custom_call.1} parent=62 // loop_header
              %s394 = sphi 0, %s398
              %p395 = scmp.ge.s32.totalorder %s394, 1
              %s399 = sphi %s389, %s389
              %s400 = sphi %s391, %s391
            $region66: #{tpu_custom_call.1} parent=62 // loop_header_branch
              %397 = sbr.rel (%p395) target = $region70
            $region67: #{tpu_custom_call.1} parent=62 // loop_body
              %v401 = vld [vmem:[%s399] sm:%s392]
              %402 = vst [vmem:[%s400] sm:%s392] %v401
            $region68: #{tpu_custom_call.1} parent=62 // loop_footer
              %s398 = sadd.s32 1, %s394
            $region69: #{tpu_custom_call.1} parent=62 // loop_footer_branch
              %393 = sbr.rel target = $region65
            $region70: #{tpu_custom_call.1} parent=62 // loop_exit
              _
          $region63: #{tpu_custom_call.1} parent=47 // pred_fallthru
            _
        $region48: #{tpu_custom_call.1} parent=43 // pred_fallthru
          _
        // Predicated region
        $region49: #{tpu_custom_call.1} parent=43 // pred_check
          %p368 = pneg %p364
        $region50: #{tpu_custom_call.1} parent=43 // pred_check_branch
          %370 = sbr.rel (%p368) target = $region52
        $region51: #{tpu_custom_call.1} parent=43 // pred_region
          %s371 = sshllo.u32 0, 1
          loop: start=0, step=1, limit=1
          $region53: #{tpu_custom_call.1} parent=51 // loop_pre_header
            _
          $region54: #{tpu_custom_call.1} parent=51 // loop_header
            %s373 = sphi 0, %s377
            %p374 = scmp.ge.s32.totalorder %s373, 1
            %s378 = sphi %s362, %s362
            %s379 = sphi [#allocation2], [#allocation2]
          $region55: #{tpu_custom_call.1} parent=51 // loop_header_branch
            %376 = sbr.rel (%p374) target = $region59
          $region56: #{tpu_custom_call.1} parent=51 // loop_body
            %v380 = vld [vmem:[%s378] sm:%s371]
            %381 = vst [vmem:[%s379] sm:%s371] %v380
          $region57: #{tpu_custom_call.1} parent=51 // loop_footer
            %s377 = sadd.s32 1, %s373
          $region58: #{tpu_custom_call.1} parent=51 // loop_footer_branch
            %372 = sbr.rel target = $region54
          $region59: #{tpu_custom_call.1} parent=51 // loop_exit
            _
        $region52: #{tpu_custom_call.1} parent=43 // pred_fallthru
          _
        // Predicated region
        $region71: #{tpu_custom_call.1} parent=43 // pred_check
          _
        $region72: #{tpu_custom_call.1} parent=43 // pred_check_branch
          %405 = sbr.rel (0) target = $region74
        $region73: #{tpu_custom_call.1} parent=43 // pred_region
          %406 = vsyncadd [#allocation4], 16
        $region74: #{tpu_custom_call.1} parent=43 // pred_fallthru
          _
        %s407 = sadd.s32 %s353, 1
        %s408 = sshra.s32 %s407, 7
        %s409 = sand.u32 %s407, 127
        %s410 = sadd.s32 %s408, %s42
        %s411 = smul.u32 %s410, 128
        %s412 = sshra.s32 %s407, 7
        %s413 = sand.u32 %s407, 127
        %s414 = sadd.s32 %s411, %s413
        %s415 = sld [smem:[#allocation6 + %s414]]
        %s416 = scalar_lea.vmem %s4, %s415
        %s417 = scalar_lea.vmem [#allocation2], 1
        %p419 = scmp.lt.u32.totalorder 1, 8
        %p420 = pneg %p419
        // Predicated region
        $region75: #{tpu_custom_call.1} parent=43 // pred_check
          _
        $region76: #{tpu_custom_call.1} parent=43 // pred_check_branch
          %422 = sbr.rel (%p419) target = $region78
        $region77: #{tpu_custom_call.1} parent=43 // pred_region
          %s437 = sand.u32 1, 7
          %p438 = scmp.eq.s32.totalorder %s437, 0
          %p439 = pneg %p438
          // Predicated region
          $region90: #{tpu_custom_call.1} parent=77 // pred_check
            _
          $region91: #{tpu_custom_call.1} parent=77 // pred_check_branch
            %441 = sbr.rel (%p438) target = $region93
          $region92: #{tpu_custom_call.1} parent=77 // pred_region
            %s442 = sand.u32 1, 7
            %s443 = ssub.s32 1, %s442
            %s444 = scalar_lea.vmem %s416, %s443
            %s445 = ssub.s32 1, %s442
            %s446 = scalar_lea.vmem %s417, %s445 [#allocation2]
            %s447 = sshllo.u32 0, %s442
            loop: start=0, step=1, limit=1
            $region94: #{tpu_custom_call.1} parent=92 // loop_pre_header
              _
            $region95: #{tpu_custom_call.1} parent=92 // loop_header
              %s449 = sphi 0, %s453
              %p450 = scmp.ge.s32.totalorder %s449, 1
              %s454 = sphi %s444, %s444
              %s455 = sphi %s446, %s446
            $region96: #{tpu_custom_call.1} parent=92 // loop_header_branch
              %452 = sbr.rel (%p450) target = $region100
            $region97: #{tpu_custom_call.1} parent=92 // loop_body
              %v456 = vld [vmem:[%s454] sm:%s447]
              %457 = vst [vmem:[%s455] sm:%s447] %v456
            $region98: #{tpu_custom_call.1} parent=92 // loop_footer
              %s453 = sadd.s32 1, %s449
            $region99: #{tpu_custom_call.1} parent=92 // loop_footer_branch
              %448 = sbr.rel target = $region95
            $region100: #{tpu_custom_call.1} parent=92 // loop_exit
              _
          $region93: #{tpu_custom_call.1} parent=77 // pred_fallthru
            _
        $region78: #{tpu_custom_call.1} parent=43 // pred_fallthru
          _
        // Predicated region
        $region79: #{tpu_custom_call.1} parent=43 // pred_check
          %p423 = pneg %p419
        $region80: #{tpu_custom_call.1} parent=43 // pred_check_branch
          %425 = sbr.rel (%p423) target = $region82
        $region81: #{tpu_custom_call.1} parent=43 // pred_region
          %s426 = sshllo.u32 0, 1
          loop: start=0, step=1, limit=1
          $region83: #{tpu_custom_call.1} parent=81 // loop_pre_header
            _
          $region84: #{tpu_custom_call.1} parent=81 // loop_header
            %s428 = sphi 0, %s432
            %p429 = scmp.ge.s32.totalorder %s428, 1
            %s433 = sphi %s416, %s416
            %s434 = sphi %s417, %s417
          $region85: #{tpu_custom_call.1} parent=81 // loop_header_branch
            %431 = sbr.rel (%p429) target = $region89
          $region86: #{tpu_custom_call.1} parent=81 // loop_body
            %v435 = vld [vmem:[%s433] sm:%s426]
            %436 = vst [vmem:[%s434] sm:%s426] %v435
          $region87: #{tpu_custom_call.1} parent=81 // loop_footer
            %s432 = sadd.s32 1, %s428
          $region88: #{tpu_custom_call.1} parent=81 // loop_footer_branch
            %427 = sbr.rel target = $region84
          $region89: #{tpu_custom_call.1} parent=81 // loop_exit
            _
        $region82: #{tpu_custom_call.1} parent=43 // pred_fallthru
          _
        // Predicated region
        $region101: #{tpu_custom_call.1} parent=43 // pred_check
          _
        $region102: #{tpu_custom_call.1} parent=43 // pred_check_branch
          %460 = sbr.rel (0) target = $region104
        $region103: #{tpu_custom_call.1} parent=43 // pred_region
          %461 = vsyncadd [#allocation4], 16
        $region104: #{tpu_custom_call.1} parent=43 // pred_fallthru
          _
        %s462 = sadd.s32 %s353, 2
        %s463 = sshra.s32 %s462, 7
        %s464 = sand.u32 %s462, 127
        %s465 = sadd.s32 %s463, %s42
        %s466 = smul.u32 %s465, 128
        %s467 = sshra.s32 %s462, 7
        %s468 = sand.u32 %s462, 127
        %s469 = sadd.s32 %s466, %s468
        %s470 = sld [smem:[#allocation6 + %s469]]
        %s471 = scalar_lea.vmem %s4, %s470
        %s472 = scalar_lea.vmem [#allocation2], 2
        %p474 = scmp.lt.u32.totalorder 1, 8
        %p475 = pneg %p474
        // Predicated region
        $region105: #{tpu_custom_call.1} parent=43 // pred_check
          _
        $region106: #{tpu_custom_call.1} parent=43 // pred_check_branch
          %477 = sbr.rel (%p474) target = $region108
        $region107: #{tpu_custom_call.1} parent=43 // pred_region
          %s492 = sand.u32 1, 7
          %p493 = scmp.eq.s32.totalorder %s492, 0
          %p494 = pneg %p493
          // Predicated region
          $region120: #{tpu_custom_call.1} parent=107 // pred_check
            _
          $region121: #{tpu_custom_call.1} parent=107 // pred_check_branch
            %496 = sbr.rel (%p493) target = $region123
          $region122: #{tpu_custom_call.1} parent=107 // pred_region
            %s497 = sand.u32 1, 7
            %s498 = ssub.s32 1, %s497
            %s499 = scalar_lea.vmem %s471, %s498
            %s500 = ssub.s32 1, %s497
            %s501 = scalar_lea.vmem %s472, %s500 [#allocation2]
            %s502 = sshllo.u32 0, %s497
            loop: start=0, step=1, limit=1
            $region124: #{tpu_custom_call.1} parent=122 // loop_pre_header
              _
            $region125: #{tpu_custom_call.1} parent=122 // loop_header
              %s504 = sphi 0, %s508
              %p505 = scmp.ge.s32.totalorder %s504, 1
              %s509 = sphi %s499, %s499
              %s510 = sphi %s501, %s501
            $region126: #{tpu_custom_call.1} parent=122 // loop_header_branch
              %507 = sbr.rel (%p505) target = $region130
            $region127: #{tpu_custom_call.1} parent=122 // loop_body
              %v511 = vld [vmem:[%s509] sm:%s502]
              %512 = vst [vmem:[%s510] sm:%s502] %v511
            $region128: #{tpu_custom_call.1} parent=122 // loop_footer
              %s508 = sadd.s32 1, %s504
            $region129: #{tpu_custom_call.1} parent=122 // loop_footer_branch
              %503 = sbr.rel target = $region125
            $region130: #{tpu_custom_call.1} parent=122 // loop_exit
              _
          $region123: #{tpu_custom_call.1} parent=107 // pred_fallthru
            _
        $region108: #{tpu_custom_call.1} parent=43 // pred_fallthru
          _
        // Predicated region
        $region109: #{tpu_custom_call.1} parent=43 // pred_check
          %p478 = pneg %p474
        $region110: #{tpu_custom_call.1} parent=43 // pred_check_branch
          %480 = sbr.rel (%p478) target = $region112
        $region111: #{tpu_custom_call.1} parent=43 // pred_region
          %s481 = sshllo.u32 0, 1
          loop: start=0, step=1, limit=1
          $region113: #{tpu_custom_call.1} parent=111 // loop_pre_header
            _
          $region114: #{tpu_custom_call.1} parent=111 // loop_header
            %s483 = sphi 0, %s487
            %p484 = scmp.ge.s32.totalorder %s483, 1
            %s488 = sphi %s471, %s471
            %s489 = sphi %s472, %s472
          $region115: #{tpu_custom_call.1} parent=111 // loop_header_branch
            %486 = sbr.rel (%p484) target = $region119
          $region116: #{tpu_custom_call.1} parent=111 // loop_body
            %v490 = vld [vmem:[%s488] sm:%s481]
            %491 = vst [vmem:[%s489] sm:%s481] %v490
          $region117: #{tpu_custom_call.1} parent=111 // loop_footer
            %s487 = sadd.s32 1, %s483
          $region118: #{tpu_custom_call.1} parent=111 // loop_footer_branch
            %482 = sbr.rel target = $region114
          $region119: #{tpu_custom_call.1} parent=111 // loop_exit
            _
        $region112: #{tpu_custom_call.1} parent=43 // pred_fallthru
          _
        // Predicated region
        $region131: #{tpu_custom_call.1} parent=43 // pred_check
          _
        $region132: #{tpu_custom_call.1} parent=43 // pred_check_branch
          %515 = sbr.rel (0) target = $region134
        $region133: #{tpu_custom_call.1} parent=43 // pred_region
          %516 = vsyncadd [#allocation4], 16
        $region134: #{tpu_custom_call.1} parent=43 // pred_fallthru
          _
        %s517 = sadd.s32 %s353, 3
        %s518 = sshra.s32 %s517, 7
        %s519 = sand.u32 %s517, 127
        %s520 = sadd.s32 %s518, %s42
        %s521 = smul.u32 %s520, 128
        %s522 = sshra.s32 %s517, 7
        %s523 = sand.u32 %s517, 127
        %s524 = sadd.s32 %s521, %s523
        %s525 = sld [smem:[#allocation6 + %s524]]
        %s526 = scalar_lea.vmem %s4, %s525
        %s527 = scalar_lea.vmem [#allocation2], 3
        %p529 = scmp.lt.u32.totalorder 1, 8
        %p530 = pneg %p529
        // Predicated region
        $region135: #{tpu_custom_call.1} parent=43 // pred_check
          _
        $region136: #{tpu_custom_call.1} parent=43 // pred_check_branch
          %532 = sbr.rel (%p529) target = $region138
        $region137: #{tpu_custom_call.1} parent=43 // pred_region
          %s547 = sand.u32 1, 7
          %p548 = scmp.eq.s32.totalorder %s547, 0
          %p549 = pneg %p548
          // Predicated region
          $region150: #{tpu_custom_call.1} parent=137 // pred_check
            _
          $region151: #{tpu_custom_call.1} parent=137 // pred_check_branch
            %551 = sbr.rel (%p548) target = $region153
          $region152: #{tpu_custom_call.1} parent=137 // pred_region
            %s552 = sand.u32 1, 7
            %s553 = ssub.s32 1, %s552
            %s554 = scalar_lea.vmem %s526, %s553
            %s555 = ssub.s32 1, %s552
            %s556 = scalar_lea.vmem %s527, %s555 [#allocation2]
            %s557 = sshllo.u32 0, %s552
            loop: start=0, step=1, limit=1
            $region154: #{tpu_custom_call.1} parent=152 // loop_pre_header
              _
            $region155: #{tpu_custom_call.1} parent=152 // loop_header
              %s559 = sphi 0, %s563
              %p560 = scmp.ge.s32.totalorder %s559, 1
              %s564 = sphi %s554, %s554
              %s565 = sphi %s556, %s556
            $region156: #{tpu_custom_call.1} parent=152 // loop_header_branch
              %562 = sbr.rel (%p560) target = $region160
            $region157: #{tpu_custom_call.1} parent=152 // loop_body
              %v566 = vld [vmem:[%s564] sm:%s557]
              %567 = vst [vmem:[%s565] sm:%s557] %v566
            $region158: #{tpu_custom_call.1} parent=152 // loop_footer
              %s563 = sadd.s32 1, %s559
            $region159: #{tpu_custom_call.1} parent=152 // loop_footer_branch
              %558 = sbr.rel target = $region155
            $region160: #{tpu_custom_call.1} parent=152 // loop_exit
              _
          $region153: #{tpu_custom_call.1} parent=137 // pred_fallthru
            _
        $region138: #{tpu_custom_call.1} parent=43 // pred_fallthru
          _
        // Predicated region
        $region139: #{tpu_custom_call.1} parent=43 // pred_check
          %p533 = pneg %p529
        $region140: #{tpu_custom_call.1} parent=43 // pred_check_branch
          %535 = sbr.rel (%p533) target = $region142
        $region141: #{tpu_custom_call.1} parent=43 // pred_region
          %s536 = sshllo.u32 0, 1
          loop: start=0, step=1, limit=1
          $region143: #{tpu_custom_call.1} parent=141 // loop_pre_header
            _
          $region144: #{tpu_custom_call.1} parent=141 // loop_header
            %s538 = sphi 0, %s542
            %p539 = scmp.ge.s32.totalorder %s538, 1
            %s543 = sphi %s526, %s526
            %s544 = sphi %s527, %s527
          $region145: #{tpu_custom_call.1} parent=141 // loop_header_branch
            %541 = sbr.rel (%p539) target = $region149
          $region146: #{tpu_custom_call.1} parent=141 // loop_body
            %v545 = vld [vmem:[%s543] sm:%s536]
            %546 = vst [vmem:[%s544] sm:%s536] %v545
          $region147: #{tpu_custom_call.1} parent=141 // loop_footer
            %s542 = sadd.s32 1, %s538
          $region148: #{tpu_custom_call.1} parent=141 // loop_footer_branch
            %537 = sbr.rel target = $region144
          $region149: #{tpu_custom_call.1} parent=141 // loop_exit
            _
        $region142: #{tpu_custom_call.1} parent=43 // pred_fallthru
          _
        // Predicated region
        $region161: #{tpu_custom_call.1} parent=43 // pred_check
          _
        $region162: #{tpu_custom_call.1} parent=43 // pred_check_branch
          %570 = sbr.rel (0) target = $region164
        $region163: #{tpu_custom_call.1} parent=43 // pred_region
          %571 = vsyncadd [#allocation4], 16
        $region164: #{tpu_custom_call.1} parent=43 // pred_fallthru
          _
        %s572 = sadd.s32 %s353, 4
        %s573 = sshra.s32 %s572, 7
        %s574 = sand.u32 %s572, 127
        %s575 = sadd.s32 %s573, %s42
        %s576 = smul.u32 %s575, 128
        %s577 = sshra.s32 %s572, 7
        %s578 = sand.u32 %s572, 127
        %s579 = sadd.s32 %s576, %s578
        %s580 = sld [smem:[#allocation6 + %s579]]
        %s581 = scalar_lea.vmem %s4, %s580
        %s582 = scalar_lea.vmem [#allocation2], 4
        %p584 = scmp.lt.u32.totalorder 1, 8
        %p585 = pneg %p584
        // Predicated region
        $region165: #{tpu_custom_call.1} parent=43 // pred_check
          _
        $region166: #{tpu_custom_call.1} parent=43 // pred_check_branch
          %587 = sbr.rel (%p584) target = $region168
        $region167: #{tpu_custom_call.1} parent=43 // pred_region
          %s602 = sand.u32 1, 7
          %p603 = scmp.eq.s32.totalorder %s602, 0
          %p604 = pneg %p603
          // Predicated region
          $region180: #{tpu_custom_call.1} parent=167 // pred_check
            _
          $region181: #{tpu_custom_call.1} parent=167 // pred_check_branch
            %606 = sbr.rel (%p603) target = $region183
          $region182: #{tpu_custom_call.1} parent=167 // pred_region
            %s607 = sand.u32 1, 7
            %s608 = ssub.s32 1, %s607
            %s609 = scalar_lea.vmem %s581, %s608
            %s610 = ssub.s32 1, %s607
            %s611 = scalar_lea.vmem %s582, %s610 [#allocation2]
            %s612 = sshllo.u32 0, %s607
            loop: start=0, step=1, limit=1
            $region184: #{tpu_custom_call.1} parent=182 // loop_pre_header
              _
            $region185: #{tpu_custom_call.1} parent=182 // loop_header
              %s614 = sphi 0, %s618
              %p615 = scmp.ge.s32.totalorder %s614, 1
              %s619 = sphi %s609, %s609
              %s620 = sphi %s611, %s611
            $region186: #{tpu_custom_call.1} parent=182 // loop_header_branch
              %617 = sbr.rel (%p615) target = $region190
            $region187: #{tpu_custom_call.1} parent=182 // loop_body
              %v621 = vld [vmem:[%s619] sm:%s612]
              %622 = vst [vmem:[%s620] sm:%s612] %v621
            $region188: #{tpu_custom_call.1} parent=182 // loop_footer
              %s618 = sadd.s32 1, %s614
            $region189: #{tpu_custom_call.1} parent=182 // loop_footer_branch
              %613 = sbr.rel target = $region185
            $region190: #{tpu_custom_call.1} parent=182 // loop_exit
              _
          $region183: #{tpu_custom_call.1} parent=167 // pred_fallthru
            _
        $region168: #{tpu_custom_call.1} parent=43 // pred_fallthru
          _
        // Predicated region
        $region169: #{tpu_custom_call.1} parent=43 // pred_check
          %p588 = pneg %p584
        $region170: #{tpu_custom_call.1} parent=43 // pred_check_branch
          %590 = sbr.rel (%p588) target = $region172
        $region171: #{tpu_custom_call.1} parent=43 // pred_region
          %s591 = sshllo.u32 0, 1
          loop: start=0, step=1, limit=1
          $region173: #{tpu_custom_call.1} parent=171 // loop_pre_header
            _
          $region174: #{tpu_custom_call.1} parent=171 // loop_header
            %s593 = sphi 0, %s597
            %p594 = scmp.ge.s32.totalorder %s593, 1
            %s598 = sphi %s581, %s581
            %s599 = sphi %s582, %s582
          $region175: #{tpu_custom_call.1} parent=171 // loop_header_branch
            %596 = sbr.rel (%p594) target = $region179
          $region176: #{tpu_custom_call.1} parent=171 // loop_body
            %v600 = vld [vmem:[%s598] sm:%s591]
            %601 = vst [vmem:[%s599] sm:%s591] %v600
          $region177: #{tpu_custom_call.1} parent=171 // loop_footer
            %s597 = sadd.s32 1, %s593
          $region178: #{tpu_custom_call.1} parent=171 // loop_footer_branch
            %592 = sbr.rel target = $region174
          $region179: #{tpu_custom_call.1} parent=171 // loop_exit
            _
        $region172: #{tpu_custom_call.1} parent=43 // pred_fallthru
          _
        // Predicated region
        $region191: #{tpu_custom_call.1} parent=43 // pred_check
          _
        $region192: #{tpu_custom_call.1} parent=43 // pred_check_branch
          %625 = sbr.rel (0) target = $region194
        $region193: #{tpu_custom_call.1} parent=43 // pred_region
          %626 = vsyncadd [#allocation4], 16
        $region194: #{tpu_custom_call.1} parent=43 // pred_fallthru
          _
        %s627 = sadd.s32 %s353, 5
        %s628 = sshra.s32 %s627, 7
        %s629 = sand.u32 %s627, 127
        %s630 = sadd.s32 %s628, %s42
        %s631 = smul.u32 %s630, 128
        %s632 = sshra.s32 %s627, 7
        %s633 = sand.u32 %s627, 127
        %s634 = sadd.s32 %s631, %s633
        %s635 = sld [smem:[#allocation6 + %s634]]
        %s636 = scalar_lea.vmem %s4, %s635
        %s637 = scalar_lea.vmem [#allocation2], 5
        %p639 = scmp.lt.u32.totalorder 1, 8
        %p640 = pneg %p639
        // Predicated region
        $region195: #{tpu_custom_call.1} parent=43 // pred_check
          _
        $region196: #{tpu_custom_call.1} parent=43 // pred_check_branch
          %642 = sbr.rel (%p639) target = $region198
        $region197: #{tpu_custom_call.1} parent=43 // pred_region
          %s657 = sand.u32 1, 7
          %p658 = scmp.eq.s32.totalorder %s657, 0
          %p659 = pneg %p658
          // Predicated region
          $region210: #{tpu_custom_call.1} parent=197 // pred_check
            _
          $region211: #{tpu_custom_call.1} parent=197 // pred_check_branch
            %661 = sbr.rel (%p658) target = $region213
          $region212: #{tpu_custom_call.1} parent=197 // pred_region
            %s662 = sand.u32 1, 7
            %s663 = ssub.s32 1, %s662
            %s664 = scalar_lea.vmem %s636, %s663
            %s665 = ssub.s32 1, %s662
            %s666 = scalar_lea.vmem %s637, %s665 [#allocation2]
            %s667 = sshllo.u32 0, %s662
            loop: start=0, step=1, limit=1
            $region214: #{tpu_custom_call.1} parent=212 // loop_pre_header
              _
            $region215: #{tpu_custom_call.1} parent=212 // loop_header
              %s669 = sphi 0, %s673
              %p670 = scmp.ge.s32.totalorder %s669, 1
              %s674 = sphi %s664, %s664
              %s675 = sphi %s666, %s666
            $region216: #{tpu_custom_call.1} parent=212 // loop_header_branch
              %672 = sbr.rel (%p670) target = $region220
            $region217: #{tpu_custom_call.1} parent=212 // loop_body
              %v676 = vld [vmem:[%s674] sm:%s667]
              %677 = vst [vmem:[%s675] sm:%s667] %v676
            $region218: #{tpu_custom_call.1} parent=212 // loop_footer
              %s673 = sadd.s32 1, %s669
            $region219: #{tpu_custom_call.1} parent=212 // loop_footer_branch
              %668 = sbr.rel target = $region215
            $region220: #{tpu_custom_call.1} parent=212 // loop_exit
              _
          $region213: #{tpu_custom_call.1} parent=197 // pred_fallthru
            _
        $region198: #{tpu_custom_call.1} parent=43 // pred_fallthru
          _
        // Predicated region
        $region199: #{tpu_custom_call.1} parent=43 // pred_check
          %p643 = pneg %p639
        $region200: #{tpu_custom_call.1} parent=43 // pred_check_branch
          %645 = sbr.rel (%p643) target = $region202
        $region201: #{tpu_custom_call.1} parent=43 // pred_region
          %s646 = sshllo.u32 0, 1
          loop: start=0, step=1, limit=1
          $region203: #{tpu_custom_call.1} parent=201 // loop_pre_header
            _
          $region204: #{tpu_custom_call.1} parent=201 // loop_header
            %s648 = sphi 0, %s652
            %p649 = scmp.ge.s32.totalorder %s648, 1
            %s653 = sphi %s636, %s636
            %s654 = sphi %s637, %s637
          $region205: #{tpu_custom_call.1} parent=201 // loop_header_branch
            %651 = sbr.rel (%p649) target = $region209
          $region206: #{tpu_custom_call.1} parent=201 // loop_body
            %v655 = vld [vmem:[%s653] sm:%s646]
            %656 = vst [vmem:[%s654] sm:%s646] %v655
          $region207: #{tpu_custom_call.1} parent=201 // loop_footer
            %s652 = sadd.s32 1, %s648
          $region208: #{tpu_custom_call.1} parent=201 // loop_footer_branch
            %647 = sbr.rel target = $region204
          $region209: #{tpu_custom_call.1} parent=201 // loop_exit
            _
        $region202: #{tpu_custom_call.1} parent=43 // pred_fallthru
          _
        // Predicated region
        $region221: #{tpu_custom_call.1} parent=43 // pred_check
          _
        $region222: #{tpu_custom_call.1} parent=43 // pred_check_branch
          %680 = sbr.rel (0) target = $region224
        $region223: #{tpu_custom_call.1} parent=43 // pred_region
          %681 = vsyncadd [#allocation4], 16
        $region224: #{tpu_custom_call.1} parent=43 // pred_fallthru
          _
        %s682 = sadd.s32 %s353, 6
        %s683 = sshra.s32 %s682, 7
        %s684 = sand.u32 %s682, 127
        %s685 = sadd.s32 %s683, %s42
        %s686 = smul.u32 %s685, 128
        %s687 = sshra.s32 %s682, 7
        %s688 = sand.u32 %s682, 127
        %s689 = sadd.s32 %s686, %s688
        %s690 = sld [smem:[#allocation6 + %s689]]
        %s691 = scalar_lea.vmem %s4, %s690
        %s692 = scalar_lea.vmem [#allocation2], 6
        %p694 = scmp.lt.u32.totalorder 1, 8
        %p695 = pneg %p694
        // Predicated region
        $region225: #{tpu_custom_call.1} parent=43 // pred_check
          _
        $region226: #{tpu_custom_call.1} parent=43 // pred_check_branch
          %697 = sbr.rel (%p694) target = $region228
        $region227: #{tpu_custom_call.1} parent=43 // pred_region
          %s712 = sand.u32 1, 7
          %p713 = scmp.eq.s32.totalorder %s712, 0
          %p714 = pneg %p713
          // Predicated region
          $region240: #{tpu_custom_call.1} parent=227 // pred_check
            _
          $region241: #{tpu_custom_call.1} parent=227 // pred_check_branch
            %716 = sbr.rel (%p713) target = $region243
          $region242: #{tpu_custom_call.1} parent=227 // pred_region
            %s717 = sand.u32 1, 7
            %s718 = ssub.s32 1, %s717
            %s719 = scalar_lea.vmem %s691, %s718
            %s720 = ssub.s32 1, %s717
            %s721 = scalar_lea.vmem %s692, %s720 [#allocation2]
            %s722 = sshllo.u32 0, %s717
            loop: start=0, step=1, limit=1
            $region244: #{tpu_custom_call.1} parent=242 // loop_pre_header
              _
            $region245: #{tpu_custom_call.1} parent=242 // loop_header
              %s724 = sphi 0, %s728
              %p725 = scmp.ge.s32.totalorder %s724, 1
              %s729 = sphi %s719, %s719
              %s730 = sphi %s721, %s721
            $region246: #{tpu_custom_call.1} parent=242 // loop_header_branch
              %727 = sbr.rel (%p725) target = $region250
            $region247: #{tpu_custom_call.1} parent=242 // loop_body
              %v731 = vld [vmem:[%s729] sm:%s722]
              %732 = vst [vmem:[%s730] sm:%s722] %v731
            $region248: #{tpu_custom_call.1} parent=242 // loop_footer
              %s728 = sadd.s32 1, %s724
            $region249: #{tpu_custom_call.1} parent=242 // loop_footer_branch
              %723 = sbr.rel target = $region245
            $region250: #{tpu_custom_call.1} parent=242 // loop_exit
              _
          $region243: #{tpu_custom_call.1} parent=227 // pred_fallthru
            _
        $region228: #{tpu_custom_call.1} parent=43 // pred_fallthru
          _
        // Predicated region
        $region229: #{tpu_custom_call.1} parent=43 // pred_check
          %p698 = pneg %p694
        $region230: #{tpu_custom_call.1} parent=43 // pred_check_branch
          %700 = sbr.rel (%p698) target = $region232
        $region231: #{tpu_custom_call.1} parent=43 // pred_region
          %s701 = sshllo.u32 0, 1
          loop: start=0, step=1, limit=1
          $region233: #{tpu_custom_call.1} parent=231 // loop_pre_header
            _
          $region234: #{tpu_custom_call.1} parent=231 // loop_header
            %s703 = sphi 0, %s707
            %p704 = scmp.ge.s32.totalorder %s703, 1
            %s708 = sphi %s691, %s691
            %s709 = sphi %s692, %s692
          $region235: #{tpu_custom_call.1} parent=231 // loop_header_branch
            %706 = sbr.rel (%p704) target = $region239
          $region236: #{tpu_custom_call.1} parent=231 // loop_body
            %v710 = vld [vmem:[%s708] sm:%s701]
            %711 = vst [vmem:[%s709] sm:%s701] %v710
          $region237: #{tpu_custom_call.1} parent=231 // loop_footer
            %s707 = sadd.s32 1, %s703
          $region238: #{tpu_custom_call.1} parent=231 // loop_footer_branch
            %702 = sbr.rel target = $region234
          $region239: #{tpu_custom_call.1} parent=231 // loop_exit
            _
        $region232: #{tpu_custom_call.1} parent=43 // pred_fallthru
          _
        // Predicated region
        $region251: #{tpu_custom_call.1} parent=43 // pred_check
          _
        $region252: #{tpu_custom_call.1} parent=43 // pred_check_branch
          %735 = sbr.rel (0) target = $region254
        $region253: #{tpu_custom_call.1} parent=43 // pred_region
          %736 = vsyncadd [#allocation4], 16
        $region254: #{tpu_custom_call.1} parent=43 // pred_fallthru
          _
        %s737 = sadd.s32 %s353, 7
        %s738 = sshra.s32 %s737, 7
        %s739 = sand.u32 %s737, 127
        %s740 = sadd.s32 %s738, %s42
        %s741 = smul.u32 %s740, 128
        %s742 = sshra.s32 %s737, 7
        %s743 = sand.u32 %s737, 127
        %s744 = sadd.s32 %s741, %s743
        %s745 = sld [smem:[#allocation6 + %s744]]
        %s746 = scalar_lea.vmem %s4, %s745
        %s747 = scalar_lea.vmem [#allocation2], 7
        %p749 = scmp.lt.u32.totalorder 1, 8
        %p750 = pneg %p749
        // Predicated region
        $region255: #{tpu_custom_call.1} parent=43 // pred_check
          _
        $region256: #{tpu_custom_call.1} parent=43 // pred_check_branch
          %752 = sbr.rel (%p749) target = $region258
        $region257: #{tpu_custom_call.1} parent=43 // pred_region
          %s767 = sand.u32 1, 7
          %p768 = scmp.eq.s32.totalorder %s767, 0
          %p769 = pneg %p768
          // Predicated region
          $region270: #{tpu_custom_call.1} parent=257 // pred_check
            _
          $region271: #{tpu_custom_call.1} parent=257 // pred_check_branch
            %771 = sbr.rel (%p768) target = $region273
          $region272: #{tpu_custom_call.1} parent=257 // pred_region
            %s772 = sand.u32 1, 7
            %s773 = ssub.s32 1, %s772
            %s774 = scalar_lea.vmem %s746, %s773
            %s775 = ssub.s32 1, %s772
            %s776 = scalar_lea.vmem %s747, %s775 [#allocation2]
            %s777 = sshllo.u32 0, %s772
            loop: start=0, step=1, limit=1
            $region274: #{tpu_custom_call.1} parent=272 // loop_pre_header
              _
            $region275: #{tpu_custom_call.1} parent=272 // loop_header
              %s779 = sphi 0, %s783
              %p780 = scmp.ge.s32.totalorder %s779, 1
              %s784 = sphi %s774, %s774
              %s785 = sphi %s776, %s776
            $region276: #{tpu_custom_call.1} parent=272 // loop_header_branch
              %782 = sbr.rel (%p780) target = $region280
            $region277: #{tpu_custom_call.1} parent=272 // loop_body
              %v786 = vld [vmem:[%s784] sm:%s777]
              %787 = vst [vmem:[%s785] sm:%s777] %v786
            $region278: #{tpu_custom_call.1} parent=272 // loop_footer
              %s783 = sadd.s32 1, %s779
            $region279: #{tpu_custom_call.1} parent=272 // loop_footer_branch
              %778 = sbr.rel target = $region275
            $region280: #{tpu_custom_call.1} parent=272 // loop_exit
              _
          $region273: #{tpu_custom_call.1} parent=257 // pred_fallthru
            _
        $region258: #{tpu_custom_call.1} parent=43 // pred_fallthru
          _
        // Predicated region
        $region259: #{tpu_custom_call.1} parent=43 // pred_check
          %p753 = pneg %p749
        $region260: #{tpu_custom_call.1} parent=43 // pred_check_branch
          %755 = sbr.rel (%p753) target = $region262
        $region261: #{tpu_custom_call.1} parent=43 // pred_region
          %s756 = sshllo.u32 0, 1
          loop: start=0, step=1, limit=1
          $region263: #{tpu_custom_call.1} parent=261 // loop_pre_header
            _
          $region264: #{tpu_custom_call.1} parent=261 // loop_header
            %s758 = sphi 0, %s762
            %p759 = scmp.ge.s32.totalorder %s758, 1
            %s763 = sphi %s746, %s746
            %s764 = sphi %s747, %s747
          $region265: #{tpu_custom_call.1} parent=261 // loop_header_branch
            %761 = sbr.rel (%p759) target = $region269
          $region266: #{tpu_custom_call.1} parent=261 // loop_body
            %v765 = vld [vmem:[%s763] sm:%s756]
            %766 = vst [vmem:[%s764] sm:%s756] %v765
          $region267: #{tpu_custom_call.1} parent=261 // loop_footer
            %s762 = sadd.s32 1, %s758
          $region268: #{tpu_custom_call.1} parent=261 // loop_footer_branch
            %757 = sbr.rel target = $region264
          $region269: #{tpu_custom_call.1} parent=261 // loop_exit
            _
        $region262: #{tpu_custom_call.1} parent=43 // pred_fallthru
          _
        // Predicated region
        $region281: #{tpu_custom_call.1} parent=43 // pred_check
          _
        $region282: #{tpu_custom_call.1} parent=43 // pred_check_branch
          %790 = sbr.rel (0) target = $region284
        $region283: #{tpu_custom_call.1} parent=43 // pred_region
          %791 = vsyncadd [#allocation4], 16
        $region284: #{tpu_custom_call.1} parent=43 // pred_fallthru
          _
        %v792 = vld [vmem:[%s345] sm:$0xff]
        %v793 = vld [vmem:[%s5] sm:$0x1]
        %v794 = vlaneseq
        %v795 = vshrl.u32 %v794, 7
        %v796 = vsub.s32 0, %v795
        %v797 = vrot.slane %v793, %v796
        %v798 = vld [vmem:[%s5 + $0x1] sm:$0x1]
        %v799 = vlaneseq
        %v800 = vshrl.u32 %v799, 7
        %v801 = vsub.s32 0, %v800
        %v802 = vrot.slane %v798, %v801
        %vm803 = vcmp.eq.s32.totalorder %v792, 1
        %v804 = vsel %vm803, 1, 0
        %805 = vset.pattern.permute.xlu0 0
        %806 = vperm.xlu0 %805, %v804
        %v807 = vpop.permute.xlu0 %806
        %vm808 = vcmp.eq.s32.totalorder %v807, 1
        %v809 = vsel %vm808, %v802, %v797
        %s810 = sld [smem:[#allocation7 + %s353]]
        %s811 = scalar_lea.vmem %s6, %s810
        %v812 = vld [vmem:[%s811] sm:$0xff]
        %s813 = smul.u32 1, 1
        %s814 = sshll.u32 %s813, 4
        %815 = dma.done [#allocation4], %s814
        %s816 = sshll.u32 %s813, 4
        %817 = dma.done [#allocation4], %s816
        %s818 = sshll.u32 %s813, 4
        %819 = dma.done [#allocation4], %s818
        %s820 = sshll.u32 %s813, 4
        %821 = dma.done [#allocation4], %s820
        %s822 = sshll.u32 %s813, 4
        %823 = dma.done [#allocation4], %s822
        %s824 = sshll.u32 %s813, 4
        %825 = dma.done [#allocation4], %s824
        %s826 = sshll.u32 %s813, 4
        %827 = dma.done [#allocation4], %s826
        %s828 = sshll.u32 %s813, 4
        %829 = dma.done [#allocation4], %s828
        %v830 = vld [vmem:[%s352] sm:$0xff]
        %v831 = vld [vmem:[#allocation2] sm:$0xff]
        %833 = vset.pattern.permute.xlu0 0
        %834 = vperm.xlu0 %833, %v830
        %v835 = vpop.permute.xlu0 %834
        %v837 = vmul.f32 %v831, %v835
        %v838 = vadd.f32 %v837, %v809
        %v839 = vadd.f32 %v838, %v812
        %vm840 = vcmask 261120
        %v841 = vsel %vm840, %v839, 0.0
        %842 = vadd.xlane.f32.xlu0 %v841
        %v843 = vpop.xlane.xlu0 %842
        %v844 = vrcp.pop 32.0
        %v845 = vmul.f32 %v843, %v844
        %v846 = vsub.f32 %v839, %v845
        %v847 = vmul.f32 %v846, %v846
        %v848 = vsel %vm840, %v847, 0.0
        %849 = vadd.xlane.f32.xlu0 %v848
        %v850 = vpop.xlane.xlu0 %849
        %v851 = vmul.f32 %v850, %v844
        %v852 = vadd.f32 %v851, 1e-12
        %v853 = vrsqrt.pop %v852
        %v854 = vmul.f32 %v846, %v853
        %v855 = vld [vmem:[%s7] sm:$0x1]
        %v857 = vlaneseq
        %v858 = vshrl.u32 %v857, 7
        %v859 = vsub.s32 0, %v858
        %v860 = vrot.slane %v855, %v859
        %v862 = vmul.f32 %v854, %v860
        %v863 = vld [vmem:[%s8] sm:$0x1]
        %v865 = vlaneseq
        %v866 = vshrl.u32 %v865, 7
        %v867 = vsub.s32 0, %v866
        %v868 = vrot.slane %v863, %v867
        %v870 = vadd.f32 %v862, %v868
        %871 = vst.msk [vmem:[%s331] sm:$0xff] %vm840, %v870
        %872 = vst.msk [vmem:[%s338] sm:$0xff] %vm840, %v837
        %s873 = sand.u32 %s200, 1
        %s874 = scalar_lea.sflag [#allocation9], %s873
        %s875 = sand.u32 %s200, 1
        %s876 = smul.addr %s875, 8
        %s877 = scalar_lea.vmem [#allocation8], %s876
        %s878 = sand.u32 %s228, 1
        %s879 = scalar_lea.sflag [#allocation11], %s878
        %s880 = sand.u32 %s228, 1
        %s881 = smul.addr %s880, 8
        %s882 = scalar_lea.vmem [#allocation10], %s881
        // Predicated region
        $region285: #{tpu_custom_call.1} parent=43 // pred_check
          %p883 = pneg %p210
        $region286: #{tpu_custom_call.1} parent=43 // pred_check_branch
          %885 = sbr.rel (%p883) target = $region288
        $region287: #{tpu_custom_call.1} parent=43 // pred_region
          %s887 = ssub.s32 128, 128
          %888 = vsyncadd %s874, %s887
          %s889 = sadd.s32 %s43, %s42
          %s890 = smul.addr %s889, 128
          %s891 = scalar_lea.hbm %s9, %s890
          %s893 = sshll.u32 %s877, 4
          %s894 = int_to_ptr.vmem [resolvable:$true] %s893
          %896 = dma.vmem_to_hbm [thread:$0]  %s894, 128, %s891, %s874
        $region288: #{tpu_custom_call.1} parent=43 // pred_fallthru
          _
        // Predicated region
        $region289: #{tpu_custom_call.1} parent=43 // pred_check
          %p897 = pneg %p238
        $region290: #{tpu_custom_call.1} parent=43 // pred_check_branch
          %899 = sbr.rel (%p897) target = $region292
        $region291: #{tpu_custom_call.1} parent=43 // pred_region
          %s901 = ssub.s32 128, 128
          %902 = vsyncadd %s879, %s901
          %s903 = sadd.s32 %s43, %s42
          %s904 = smul.addr %s903, 128
          %s905 = scalar_lea.hbm %s10, %s904
          %s907 = sshll.u32 %s882, 4
          %s908 = int_to_ptr.vmem [resolvable:$true] %s907
          %910 = dma.vmem_to_hbm [thread:$0]  %s908, 128, %s905, %s879
        $region292: #{tpu_custom_call.1} parent=43 // pred_fallthru
          _
      $region44: #{tpu_custom_call.1} parent=5 // pred_fallthru
        _
      %p911 = scmp.le.s32.totalorder 2, %s33
      // Predicated region
      $region293: #{tpu_custom_call.1} parent=5 // pred_check
        %p912 = pneg %p911
      $region294: #{tpu_custom_call.1} parent=5 // pred_check_branch
        %914 = sbr.rel (%p912) target = $region296
      $region295: #{tpu_custom_call.1} parent=5 // pred_region
        %s915 = ssub.s32 %s33, 2
        // Predicated region
        $region297: #{tpu_custom_call.1} parent=295 // pred_check
          %p916 = pneg %p216
        $region298: #{tpu_custom_call.1} parent=295 // pred_check_branch
          %918 = sbr.rel (%p916) target = $region300
        $region299: #{tpu_custom_call.1} parent=295 // pred_region
          %s919 = sand.u32 %s201, 1
          %s920 = scalar_lea.sflag [#allocation9], %s919
          %s921 = sand.u32 %s201, 1
          %s922 = smul.addr %s921, 8
          %s923 = scalar_lea.vmem [#allocation8], %s922
          %924 = dma.done %s920, 128
        $region300: #{tpu_custom_call.1} parent=295 // pred_fallthru
          _
        // Predicated region
        $region301: #{tpu_custom_call.1} parent=295 // pred_check
          %p925 = pneg %p244
        $region302: #{tpu_custom_call.1} parent=295 // pred_check_branch
          %927 = sbr.rel (%p925) target = $region304
        $region303: #{tpu_custom_call.1} parent=295 // pred_region
          %s928 = sand.u32 %s229, 1
          %s929 = scalar_lea.sflag [#allocation11], %s928
          %s930 = sand.u32 %s229, 1
          %s931 = smul.addr %s930, 8
          %s932 = scalar_lea.vmem [#allocation10], %s931
          %933 = dma.done %s929, 128
        $region304: #{tpu_custom_call.1} parent=295 // pred_fallthru
          _
      $region296: #{tpu_custom_call.1} parent=5 // pred_fallthru
        _
    $region6: #{tpu_custom_call.1} parent=1 // loop_footer
      %s37 = sadd.s32 1, %s33
    $region7: #{tpu_custom_call.1} parent=1 // loop_footer_branch
      %32 = sbr.rel target = $region3
    $region8: #{tpu_custom_call.1} parent=1 // loop_exit
      _
    %934 = vsyncpa [#allocation9], 1
    %s935 = scalar_lea.sflag [#allocation9], 1
    %936 = vsyncpa %s935, 1
    %937 = vsyncpa [#allocation11], 1
    %s938 = scalar_lea.sflag [#allocation11], 1
    %939 = vsyncpa %s938, 1
  %940 = vsyncmov [#allocation4]
  %s941 = vpop.sfrf %940
  %p942 = scmp.eq.s32.totalorder %s941, 0
  %p943 = pneg %p942
  %945 = shalt.err (%p943)

</llo_original>
